<compile_context>
chip_gen: v7x
topology: tpu7x:2x2x1
jax: 0.10.0
libtpu: 0.0.40
codegen_flags: <defaults>
</compile_context>

<pallas_src>
import jax
import jax.numpy as jnp
from jax.experimental import pallas as pl
from jax.experimental.pallas import tpu as pltpu


def _round_up(x, m):
    return ((x + m - 1) // m) * m


def _conv_kernel(xe_ref, xo_ref, w_ref, b_ref, o_ref, carry_ref):
    # xe_ref / xo_ref : (1, C, TN)  even / odd input samples for this column tile
    # w_ref           : (3, TM, C)  per-tap weights
    # b_ref           : (TM, 1)     f32 bias
    # o_ref           : (1, TM, TN)
    # carry_ref       : (C, 1)      last odd column of the previous column tile
    j = pl.program_id(1)          # column tile index
    i = pl.program_id(2)          # output-channel tile index (innermost)

    xe = xe_ref[0]                # (C, TN) -> tap k=1: x[2t]
    xo = xo_ref[0]                # (C, TN) -> tap k=2: x[2t+1]

    # tap k=0: x[2t-1] = odd plane shifted right by one column.  Column 0 comes
    # from the previous column tile (carried in VMEM) or the conv zero-pad.
    prev = carry_ref[...]                                       # (C, 1)
    prev = jnp.where(j == 0, jnp.zeros_like(prev), prev)
    rolled = pltpu.roll(xo, 1, 1)                               # XLU lane rotate
    col = jax.lax.broadcasted_iota(jnp.int32, xo.shape, 1)
    tap0 = jnp.where(col == 0, prev, rolled)                    # (C, TN)

    f32 = jnp.float32
    prec = jax.lax.Precision.HIGHEST if xe.dtype == f32 else None
    acc = jnp.dot(w_ref[1], xe, preferred_element_type=f32, precision=prec)
    acc = acc + jnp.dot(w_ref[0], tap0, preferred_element_type=f32, precision=prec)
    acc = acc + jnp.dot(w_ref[2], xo, preferred_element_type=f32, precision=prec)
    o_ref[0] = (acc + b_ref[...]).astype(o_ref.dtype)

    # Update the carry only on the last channel tile so every channel tile of the
    # current column tile still sees the previous tile's boundary column.
    @pl.when(i == pl.num_programs(2) - 1)
    def _():
        carry_ref[...] = xo[:, -1:]


def downsample1d(x, weight, bias, *, compute_dtype=jnp.bfloat16, col_tile=None):
    """Conv1d(dim, dim, kernel=3, stride=2, padding=1).

    x: (B, C, L); weight: (C, C, 3); bias: (C,).  Returns (B, C, (L-1)//2 + 1)
    in x.dtype (bf16 matmul operands by default, f32 accumulation).
    """
    B, C, L = x.shape
    Lout = (L - 1) // 2 + 1

    itemsize = jnp.dtype(compute_dtype).itemsize
    out_itemsize = jnp.dtype(x.dtype).itemsize

    # Chip-aware VMEM budget (v5e/v6e: 128 MiB, v7x: 64 MiB per TensorCore).
    try:
        vmem_cap = int(pltpu.get_tpu_info().vmem_capacity_bytes)
    except Exception:
        vmem_cap = 64 * 1024 * 1024
    vmem_limit = min(int(vmem_cap * 0.6), 96 * 1024 * 1024)

    if col_tile is None:
        col_tile = 1024 if vmem_cap >= 100 * 1024 * 1024 else 512

    # Output-channel tile: keep the whole weight stack VMEM-resident unless huge.
    w_resident_bytes = 2 * 3 * C * C * itemsize
    if C % 128 == 0 and w_resident_bytes > max(vmem_limit // 3, 8 * 1024 * 1024):
        tm = 128
    else:
        tm = C

    # Lane-dense column tile over Lout (per batch).
    if Lout < 128:
        tn = Lout                                   # full-extent block, no padding
    else:
        tn = min(_round_up(col_tile, 128), _round_up(Lout, 128))

        def footprint(t):
            return (2 * 2 * C * t * itemsize        # xe + xo, double-buffered
                    + 2 * 3 * tm * C * itemsize     # weight stack
                    + 2 * tm * t * out_itemsize     # output tile
                    + C * itemsize + 2 * tm * 4)    # carry + bias

        while tn > 128 and footprint(tn) > int(0.8 * vmem_limit):
            tn = max(128, (tn // 2) // 128 * 128)
    lout_p = _round_up(Lout, tn)

    # Even / odd de-interleave: the only HBM pass over x outside the kernel.
    # The three conv taps are re-assembled inside the kernel, so no 1.5x im2col
    # is materialised and no output transpose is needed.
    xe = x[:, :, 0::2].astype(compute_dtype)        # (B, C, Lout): x[2t]
    xo = x[:, :, 1::2].astype(compute_dtype)        # x[2t+1] (may be 1 short)
    pad_e = lout_p - xe.shape[-1]
    pad_o = lout_p - xo.shape[-1]
    if pad_e or pad_o:
        xe = jnp.pad(xe, ((0, 0), (0, 0), (0, pad_e)))
        xo = jnp.pad(xo, ((0, 0), (0, 0), (0, pad_o)))

    # (3, C_out, C_in) per-tap weights; bias stays f32 for the epilogue add.
    w_stack = jnp.transpose(weight, (2, 0, 1)).astype(compute_dtype)
    bias2d = bias.reshape(C, 1).astype(jnp.float32)

    grid = (B, lout_p // tn, C // tm)

    out = pl.pallas_call(
        _conv_kernel,
        out_shape=jax.ShapeDtypeStruct((B, C, lout_p), x.dtype),
        grid_spec=pltpu.PrefetchScalarGridSpec(
            num_scalar_prefetch=0,
            grid=grid,
            in_specs=[
                # xe / xo block indices are constant along the innermost channel
                # axis, so the large operands stream from HBM exactly once.
                pl.BlockSpec((1, C, tn), lambda b, j, i: (b, 0, j)),
                pl.BlockSpec((1, C, tn), lambda b, j, i: (b, 0, j)),
                pl.BlockSpec((3, tm, C), lambda b, j, i: (0, i, 0)),
                pl.BlockSpec((tm, 1), lambda b, j, i: (i, 0)),
            ],
            out_specs=pl.BlockSpec((1, tm, tn), lambda b, j, i: (b, i, j)),
            scratch_shapes=[pltpu.VMEM((C, 1), compute_dtype)],
        ),
        compiler_params=pltpu.CompilerParams(
            # Batch axis is megacore-shardable; the column axis carries the
            # boundary column between tiles, so it must stay sequential.
            dimension_semantics=("parallel", "arbitrary", "arbitrary"),
            vmem_limit_bytes=vmem_limit,
        ),
    )(xe, xo, w_stack, bias2d)

    if lout_p != Lout:
        out = out[:, :, :Lout]
    return out


def _reference_conv1d(x, weight, bias):
    # Pure-JAX reference (conv_general_dilated) for correctness checks.
    out = jax.lax.conv_general_dilated(
        x, weight,
        window_strides=(2,),
        padding=((1, 1),),
        dimension_numbers=("NCH", "OIH", "NCH"),
        precision=jax.lax.Precision.HIGHEST,
    )
    return out + bias[None, :, None]


if __name__ == "__main__":
    root_key = jax.random.PRNGKey(0)

    def make_inputs(B, C, L, salt):
        kx, kw, kb = jax.random.split(jax.random.fold_in(root_key, salt), 3)
        x = jax.random.normal(kx, (B, C, L), dtype=jnp.float32)
        weight = jax.random.normal(kw, (C, C, 3), dtype=jnp.float32) * 0.1
        bias = jax.random.normal(kb, (C,), dtype=jnp.float32) * 0.1
        return x, weight, bias

    def check(B, C, L, *, compute_dtype, atol, rtol, **kw):
        x, w, b = make_inputs(B, C, L, salt=B * 100000 + C * 1000 + L)
        out = jax.block_until_ready(
            downsample1d(x, w, b, compute_dtype=compute_dtype, **kw))
        ref = _reference_conv1d(x, w, b)
        Lout = (L - 1) // 2 + 1
        assert out.shape == (B, C, Lout), out.shape
        assert jnp.allclose(out, ref, atol=atol, rtol=rtol), (
            "max abs err", float(jnp.max(jnp.abs(out - ref))))

    # f32 operands, even / odd L (small shapes, single column tile)
    check(2, 8, 16, compute_dtype=jnp.float32, atol=2e-3, rtol=2e-3)
    check(3, 8, 15, compute_dtype=jnp.float32, atol=2e-3, rtol=2e-3)

    # multi column-tile path: exercises the carried boundary column + padding
    check(2, 8, 600, compute_dtype=jnp.float32, atol=2e-3, rtol=2e-3, col_tile=128)

    # default bf16 operands, f32 accumulation
    check(2, 8, 16, compute_dtype=jnp.bfloat16, atol=5e-2, rtol=5e-2)

    print("KERNEL_OK")
</pallas_src>

<mosaic_0001>
module attributes {stable_mosaic.version = 11 : i64} {
  func.func @_conv_kernel(%arg0: i32, %arg1: i32, %arg2: i32, %arg3: memref<1x8x8xf32, #tpu.memory_space<vmem>>, %arg4: memref<1x8x8xf32, #tpu.memory_space<vmem>>, %arg5: memref<3x8x8xf32, #tpu.memory_space<vmem>>, %arg6: memref<8x1xf32, #tpu.memory_space<vmem>>, %arg7: memref<1x8x8xf32, #tpu.memory_space<vmem>>, %arg8: memref<8x1xf32, #tpu.memory_space<vmem>>) attributes {dimension_semantics = [#tpu.dimension_semantics<parallel>, #tpu.dimension_semantics<arbitrary>, #tpu.dimension_semantics<arbitrary>], iteration_bounds = array<i64: 2, 1, 1>, scalar_prefetch = 0 : i64, scratch_operands = 1 : i64, tpu.core_type = #tpu.core_type<tc>, window_params = [{transform_indices = @transform_0, window_bounds = array<i64: 1, 8, 8>}, {transform_indices = @transform_1, window_bounds = array<i64: 1, 8, 8>}, {transform_indices = @transform_2, window_bounds = array<i64: 3, 8, 8>}, {transform_indices = @transform_3, window_bounds = array<i64: 8, 1>}, {transform_indices = @transform_4, window_bounds = array<i64: 1, 8, 8>}]} {
    %c0 = arith.constant 0 : index
    %c0_0 = arith.constant 0 : index
    %c0_1 = arith.constant 0 : index
    %0 = vector.load %arg3[%c0, %c0_0, %c0_1] : memref<1x8x8xf32, #tpu.memory_space<vmem>>, vector<1x8x8xf32>
    %1 = vector.shape_cast %0 : vector<1x8x8xf32> to vector<8x8xf32>
    %c0_2 = arith.constant 0 : index
    %c0_3 = arith.constant 0 : index
    %c0_4 = arith.constant 0 : index
    %2 = vector.load %arg4[%c0_2, %c0_3, %c0_4] : memref<1x8x8xf32, #tpu.memory_space<vmem>>, vector<1x8x8xf32>
    %3 = vector.shape_cast %2 : vector<1x8x8xf32> to vector<8x8xf32>
    %c0_5 = arith.constant 0 : index
    %c0_6 = arith.constant 0 : index
    %4 = vector.load %arg8[%c0_5, %c0_6] : memref<8x1xf32, #tpu.memory_space<vmem>>, vector<8x1xf32>
    %c0_i32 = arith.constant 0 : i32
    %5 = arith.cmpi eq, %arg1, %c0_i32 : i32
    %cst = arith.constant 0.000000e+00 : f32
    %6 = vector.broadcast %cst : f32 to vector<8x1xf32>
    %7 = arith.select %5, %6, %4 : vector<8x1xf32>
    %c1_i32 = arith.constant 1 : i32
    %8 = tpu.dynamic_rotate %3 by %c1_i32 dim 1 : vector<8x8xf32>, i32 -> vector<8x8xf32>
    %9 = tpu.iota {dimensions = array<i32: 1>} : vector<8x8xi32>
    %c0_i32_7 = arith.constant 0 : i32
    %10 = vector.broadcast %c0_i32_7 : i32 to vector<8x8xi32>
    %11 = arith.cmpi eq, %9, %10 : vector<8x8xi32>
    %12 = vector.shape_cast %7 : vector<8x1xf32> to vector<8x1xf32>
    %13 = vector.broadcast %12 : vector<8x1xf32> to vector<8x8xf32>
    %14 = arith.select %11, %13, %8 : vector<8x8xi1>, vector<8x8xf32>
    %c1 = arith.constant 1 : index
    %c0_8 = arith.constant 0 : index
    %c0_9 = arith.constant 0 : index
    %15 = vector.load %arg5[%c1, %c0_8, %c0_9] : memref<3x8x8xf32, #tpu.memory_space<vmem>>, vector<1x8x8xf32>
    %16 = vector.shape_cast %15 : vector<1x8x8xf32> to vector<8x8xf32>
    %cst_10 = arith.constant dense<0.000000e+00> : vector<8x8xf32>
    %17 = tpu.matmul %16, %1, %cst_10 {dimension_numbers = #tpu.dot_dimension_numbers<[1], [0], [0], [1], [0, 0, 1, 1], [], []>, precision = #tpu.contract_precision<fp32>} : vector<8x8xf32>, vector<8x8xf32>, vector<8x8xf32> -> vector<8x8xf32>
    %c0_11 = arith.constant 0 : index
    %c0_12 = arith.constant 0 : index
    %c0_13 = arith.constant 0 : index
    %18 = vector.load %arg5[%c0_11, %c0_12, %c0_13] : memref<3x8x8xf32, #tpu.memory_space<vmem>>, vector<1x8x8xf32>
    %19 = vector.shape_cast %18 : vector<1x8x8xf32> to vector<8x8xf32>
    %cst_14 = arith.constant dense<0.000000e+00> : vector<8x8xf32>
    %20 = tpu.matmul %19, %14, %cst_14 {dimension_numbers = #tpu.dot_dimension_numbers<[1], [0], [0], [1], [0, 0, 1, 1], [], []>, precision = #tpu.contract_precision<fp32>} : vector<8x8xf32>, vector<8x8xf32>, vector<8x8xf32> -> vector<8x8xf32>
    %21 = arith.addf %17, %20 : vector<8x8xf32>
    %c2 = arith.constant 2 : index
    %c0_15 = arith.constant 0 : index
    %c0_16 = arith.constant 0 : index
    %22 = vector.load %arg5[%c2, %c0_15, %c0_16] : memref<3x8x8xf32, #tpu.memory_space<vmem>>, vector<1x8x8xf32>
    %23 = vector.shape_cast %22 : vector<1x8x8xf32> to vector<8x8xf32>
    %cst_17 = arith.constant dense<0.000000e+00> : vector<8x8xf32>
    %24 = tpu.matmul %23, %3, %cst_17 {dimension_numbers = #tpu.dot_dimension_numbers<[1], [0], [0], [1], [0, 0, 1, 1], [], []>, precision = #tpu.contract_precision<fp32>} : vector<8x8xf32>, vector<8x8xf32>, vector<8x8xf32> -> vector<8x8xf32>
    %25 = arith.addf %21, %24 : vector<8x8xf32>
    %c0_18 = arith.constant 0 : index
    %c0_19 = arith.constant 0 : index
    %26 = vector.load %arg6[%c0_18, %c0_19] : memref<8x1xf32, #tpu.memory_space<vmem>>, vector<8x1xf32>
    %27 = vector.broadcast %26 : vector<8x1xf32> to vector<8x8xf32>
    %28 = arith.addf %25, %27 : vector<8x8xf32>
    %c0_20 = arith.constant 0 : index
    %c0_21 = arith.constant 0 : index
    %c0_22 = arith.constant 0 : index
    %29 = vector.load %arg7[%c0_20, %c0_21, %c0_22] : memref<1x8x8xf32, #tpu.memory_space<vmem>>, vector<1x8x8xf32>
    %30 = vector.shape_cast %29 : vector<1x8x8xf32> to vector<8x8xf32>
    %31 = vector.shape_cast %28 : vector<8x8xf32> to vector<1x8x8xf32>
    tpu.vector_store %arg7[%c0_20, %c0_21, %c0_22], %31 {strides = array<i32>} : memref<1x8x8xf32, #tpu.memory_space<vmem>>, vector<1x8x8xf32>,
    %c0_i32_23 = arith.constant 0 : i32
    %32 = arith.cmpi eq, %arg2, %c0_i32_23 : i32
    %33 = arith.extui %32 : i1 to i32
    %c0_i32_24 = arith.constant 0 : i32
    %34 = arith.cmpi ne, %33, %c0_i32_24 : i32
    scf.if %34 {
      %35 = vector.extract_strided_slice %3 {offsets = [0, 7], sizes = [8, 1], strides = [1, 1]} : vector<8x8xf32> to vector<8x1xf32>
      %c0_25 = arith.constant 0 : index
      %c0_26 = arith.constant 0 : index
      %36 = vector.load %arg8[%c0_25, %c0_26] : memref<8x1xf32, #tpu.memory_space<vmem>>, vector<8x1xf32>
      tpu.vector_store %arg8[%c0_25, %c0_26], %35 {strides = array<i32>} : memref<8x1xf32, #tpu.memory_space<vmem>>, vector<8x1xf32>,
    } else {
    }
    return
  }
  func.func @transform_0(%arg0: i32, %arg1: i32, %arg2: i32) -> (i32, i32, i32) {
    %c0_i32 = arith.constant 0 : i32
    %c0_i32_0 = arith.constant 0 : i32
    return %arg0, %c0_i32, %arg1 : i32, i32, i32
  }
  func.func @transform_1(%arg0: i32, %arg1: i32, %arg2: i32) -> (i32, i32, i32) {
    %c0_i32 = arith.constant 0 : i32
    %c0_i32_0 = arith.constant 0 : i32
    return %arg0, %c0_i32, %arg1 : i32, i32, i32
  }
  func.func @transform_2(%arg0: i32, %arg1: i32, %arg2: i32) -> (i32, i32, i32) {
    %c0_i32 = arith.constant 0 : i32
    %c0_i32_0 = arith.constant 0 : i32
    %c0_i32_1 = arith.constant 0 : i32
    return %c0_i32, %arg2, %c0_i32_0 : i32, i32, i32
  }
  func.func @transform_3(%arg0: i32, %arg1: i32, %arg2: i32) -> (i32, i32) {
    %c0_i32 = arith.constant 0 : i32
    %c0_i32_0 = arith.constant 0 : i32
    return %arg2, %c0_i32 : i32, i32
  }
  func.func @transform_4(%arg0: i32, %arg1: i32, %arg2: i32) -> (i32, i32, i32) {
    %c0_i32 = arith.constant 0 : i32
    return %arg0, %arg2, %arg1 : i32, i32, i32
  }
}

</mosaic_0001>

<llo_original>
// kernel: tpu_custom_call.1
$region0: #{tpu_custom_call.1}
  #allocation0 [shape = 'u32[]', space=smem, size = 0x4, offset = 0x4, fixed_abs, tag = 'smem constant byte address 0x4 - core index']
  #allocation1 [shape = 'u32[144,128]{1,0:T(1,128)}', space=vmem, size = 0x12000, scoped, tag = 'internal scratch']
  #allocation2 [shape = 'f32[8,1]{1,0:T(8,128)}', space=vmem, size = 0x1000, scoped, tag = 'scratch operand']
  %s0 = inlined_call_operand.hbm [shape: f32[2,8,8], index: 0, kind: input, shape index: {}]
  %s1 = inlined_call_operand.hbm [shape: f32[2,8,8], index: 1, kind: input, shape index: {}]
  %s2 = inlined_call_operand.hbm [shape: f32[3,8,8], index: 2, kind: input, shape index: {}]
  %s3 = inlined_call_operand.vmem [shape: f32[8,1], index: 3, kind: input, shape index: {}]
  %s4 = inlined_call_operand.hbm [shape: f32[2,8,8], index: 4, kind: output, shape index: {}]
  %s5 = sld [smem:[#allocation0]]
  $region65: #{tpu_custom_call.1} parent=0
    _
  %s7 = ssub.s32 1, %s5
  %s8 = scalar_select 0, %s7, %s5
  $region1: #{tpu_custom_call.1} parent=0
    #allocation3 [shape = 'u8[8192]{0}', space=vmem, size = 0x2000, scoped, tag = 'input window, operand 0']
    #allocation4 [shape = 's32[2]{0}', space=sflag, size = 0x8, scoped, tag = 'scoped memory for tpu_custom_call.1']
    #allocation5 [shape = 's32[2]{0}', space=sflag, size = 0x8, scoped, tag = 'scoped memory for tpu_custom_call.1']
    #allocation6 [shape = 'u8[8192]{0}', space=vmem, size = 0x2000, scoped, tag = 'input window, operand 1']
    #allocation7 [shape = 's32[2]{0}', space=sflag, size = 0x8, scoped, tag = 'scoped memory for tpu_custom_call.1']
    #allocation8 [shape = 'u8[12288]{0}', space=vmem, size = 0x3000, scoped, tag = 'input window, operand 2, single buffered']
    #allocation9 [shape = 'u8[8192]{0}', space=vmem, size = 0x2000, scoped, tag = 'output window, operand 0']
    %9 = vsyncpa [#allocation4], 0
    %s10 = scalar_lea.sflag [#allocation4], 1
    %11 = vsyncpa %s10, 0
    %12 = vsyncpa [#allocation7], 0
    %s13 = scalar_lea.sflag [#allocation7], 1
    %14 = vsyncpa %s13, 0
    %15 = vsyncpa [#allocation5], 0
    %s16 = scalar_lea.sflag [#allocation5], 1
    %17 = vsyncpa %s16, 0
    loop: start=0, step=1, limit=4
    $region2: #{tpu_custom_call.1} parent=1 // loop_pre_header
      _
    $region3: #{tpu_custom_call.1} parent=1 // loop_header
      %s19 = sphi 0, %s23
      %p20 = scmp.ge.s32.totalorder %s19, 4
      %s26 = sphi 0, %s45
      %s27 = sphi 0, %s41
      %s28 = sphi 0, %s37
      %s29 = sphi 0, %s26
      %s30 = sphi 0, %s27
      %s31 = sphi 0, %s28
      %s32 = sphi 0, %s29
      %s33 = sphi 0, %s30
      %s34 = sphi 0, %s31
      %s50 = sphi 0, %s52
      %s53 = sphi 0, %s50
      %s54 = sphi 0, %s53
      %s70 = sphi 0, %s54
      %s78 = sphi 0, %s80
      %s81 = sphi 0, %s78
      %s82 = sphi 0, %s81
      %s98 = sphi 0, %s82
      %s104 = sphi 0, %s106
      %s107 = sphi 0, %s104
      %s108 = sphi 0, %s107
      %s124 = sphi 0, %s108
      %s130 = sphi 0, %s132
      %s133 = sphi 0, %s130
      %s134 = sphi 0, %s133
      %s150 = sphi 0, %s134
      %s160 = sphi 0, %s162
      %s163 = sphi 0, %s160
      %s164 = sphi 0, %s163
      %s180 = sphi 0, %s164
    $region4: #{tpu_custom_call.1} parent=1 // loop_header_branch
      %22 = sbr.rel (%p20) target = $region8
    $region5: #{tpu_custom_call.1} parent=1 // loop_body
      %s24 = ssub.s32 %s19, 1
      %s25 = ssub.s32 %s19, 2
      %s35 = sadd.s32 1, %s28
      %p36 = scmp.ge.s32.totalorder %s35, 1
      %s37 = scalar_select %p36, 0, %s35
      %s38 = sadd.s32 1, %s27
      %s39 = scalar_select %p36, %s38, %s27
      %p40 = scmp.ge.s32.totalorder %s39, 1
      %s41 = scalar_select %p40, 0, %s39
      %s42 = sadd.s32 1, %s26
      %s43 = scalar_select %p40, %s42, %s26
      %p44 = scmp.ge.s32.totalorder %s43, 2
      %s45 = scalar_select %p44, 0, %s43
      %s46 = ssub.s32 %s26, %s45
      %s47 = ssub.s32 %s27, %s41
      %s48 = sor.u32 %s46, %s47
      %p49 = scmp.eq.s32.totalorder %s48, 0
      %s51 = sadd.s32 %s50, 1
      %s52 = scalar_select %p49, %s50, %s51
      %p55 = pneg %p49
      %p56 = scmp.eq.s32.totalorder %s19, 1
      %p57 = por %p55, %p56
      %p58 = scmp.ne.s32.totalorder %s50, %s53
      %p59 = scmp.eq.s32.totalorder %s19, 0
      %p60 = por %p58, %p59
      %p61 = scmp.ne.s32.totalorder %s50, %s53
      %p62 = scmp.eq.s32.totalorder %s24, 1
      %p63 = por %p61, %p62
      %p64 = scmp.ne.s32.totalorder %s53, %s54
      %p65 = scmp.eq.s32.totalorder %s24, 0
      %p66 = por %p64, %p65
      %p67 = scmp.ne.s32.totalorder %s53, %s54
      %p68 = scmp.eq.s32.totalorder %s25, 1
      %p69 = por %p67, %p68
      %p71 = scmp.ne.s32.totalorder %s54, %s70
      %p72 = scmp.eq.s32.totalorder %s25, 0
      %p73 = por %p71, %p72
      %s74 = ssub.s32 %s26, %s45
      %s75 = ssub.s32 %s27, %s41
      %s76 = sor.u32 %s74, %s75
      %p77 = scmp.eq.s32.totalorder %s76, 0
      %s79 = sadd.s32 %s78, 1
      %s80 = scalar_select %p77, %s78, %s79
      %p83 = pneg %p77
      %p84 = scmp.eq.s32.totalorder %s19, 1
      %p85 = por %p83, %p84
      %p86 = scmp.ne.s32.totalorder %s78, %s81
      %p87 = scmp.eq.s32.totalorder %s19, 0
      %p88 = por %p86, %p87
      %p89 = scmp.ne.s32.totalorder %s78, %s81
      %p90 = scmp.eq.s32.totalorder %s24, 1
      %p91 = por %p89, %p90
      %p92 = scmp.ne.s32.totalorder %s81, %s82
      %p93 = scmp.eq.s32.totalorder %s24, 0
      %p94 = por %p92, %p93
      %p95 = scmp.ne.s32.totalorder %s81, %s82
      %p96 = scmp.eq.s32.totalorder %s25, 1
      %p97 = por %p95, %p96
      %p99 = scmp.ne.s32.totalorder %s82, %s98
      %p100 = scmp.eq.s32.totalorder %s25, 0
      %p101 = por %p99, %p100
      %s102 = ssub.s32 %s28, %s37
      %p103 = scmp.eq.s32.totalorder %s102, 0
      %s105 = sadd.s32 %s104, 1
      %s106 = scalar_select %p103, %s104, %s105
      %p109 = pneg %p103
      %p110 = scmp.eq.s32.totalorder %s19, 1
      %p111 = por %p109, %p110
      %p112 = scmp.ne.s32.totalorder %s104, %s107
      %p113 = scmp.eq.s32.totalorder %s19, 0
      %p114 = por %p112, %p113
      %p115 = scmp.ne.s32.totalorder %s104, %s107
      %p116 = scmp.eq.s32.totalorder %s24, 1
      %p117 = por %p115, %p116
      %p118 = scmp.ne.s32.totalorder %s107, %s108
      %p119 = scmp.eq.s32.totalorder %s24, 0
      %p120 = por %p118, %p119
      %p121 = scmp.ne.s32.totalorder %s107, %s108
      %p122 = scmp.eq.s32.totalorder %s25, 1
      %p123 = por %p121, %p122
      %p125 = scmp.ne.s32.totalorder %s108, %s124
      %p126 = scmp.eq.s32.totalorder %s25, 0
      %p127 = por %p125, %p126
      %s128 = ssub.s32 %s28, %s37
      %p129 = scmp.eq.s32.totalorder %s128, 0
      %s131 = sadd.s32 %s130, 1
      %s132 = scalar_select %p129, %s130, %s131
      %p135 = pneg %p129
      %p136 = scmp.eq.s32.totalorder %s19, 1
      %p137 = por %p135, %p136
      %p138 = scmp.ne.s32.totalorder %s130, %s133
      %p139 = scmp.eq.s32.totalorder %s19, 0
      %p140 = por %p138, %p139
      %p141 = scmp.ne.s32.totalorder %s130, %s133
      %p142 = scmp.eq.s32.totalorder %s24, 1
      %p143 = por %p141, %p142
      %p144 = scmp.ne.s32.totalorder %s133, %s134
      %p145 = scmp.eq.s32.totalorder %s24, 0
      %p146 = por %p144, %p145
      %p147 = scmp.ne.s32.totalorder %s133, %s134
      %p148 = scmp.eq.s32.totalorder %s25, 1
      %p149 = por %p147, %p148
      %p151 = scmp.ne.s32.totalorder %s134, %s150
      %p152 = scmp.eq.s32.totalorder %s25, 0
      %p153 = por %p151, %p152
      %s154 = ssub.s32 %s26, %s45
      %s155 = ssub.s32 %s28, %s37
      %s156 = sor.u32 %s154, %s155
      %s157 = ssub.s32 %s27, %s41
      %s158 = sor.u32 %s156, %s157
      %p159 = scmp.eq.s32.totalorder %s158, 0
      %s161 = sadd.s32 %s160, 1
      %s162 = scalar_select %p159, %s160, %s161
      %p165 = pneg %p159
      %p166 = scmp.eq.s32.totalorder %s19, 1
      %p167 = por %p165, %p166
      %p168 = scmp.ne.s32.totalorder %s160, %s163
      %p169 = scmp.eq.s32.totalorder %s19, 0
      %p170 = por %p168, %p169
      %p171 = scmp.ne.s32.totalorder %s160, %s163
      %p172 = scmp.eq.s32.totalorder %s24, 1
      %p173 = por %p171, %p172
      %p174 = scmp.ne.s32.totalorder %s163, %s164
      %p175 = scmp.eq.s32.totalorder %s24, 0
      %p176 = por %p174, %p175
      %p177 = scmp.ne.s32.totalorder %s163, %s164
      %p178 = scmp.eq.s32.totalorder %s25, 1
      %p179 = por %p177, %p178
      %p181 = scmp.ne.s32.totalorder %s164, %s180
      %p182 = scmp.eq.s32.totalorder %s25, 0
      %p183 = por %p181, %p182
      %p184 = scmp.le.s32.totalorder 1, %s19
      %p185 = scmp.lt.s32.totalorder %s19, 3
      %p186 = pnand %p184, %p185
      %p187 = pneg %p186
      // Predicated region
      $region9: #{tpu_custom_call.1} parent=5 // pred_check
        _
      $region10: #{tpu_custom_call.1} parent=5 // pred_check_branch
        %189 = sbr.rel (%p186) target = $region12
      $region11: #{tpu_custom_call.1} parent=5 // pred_region
        %s190 = ssub.s32 %s19, 1
        // Predicated region
        $region13: #{tpu_custom_call.1} parent=11 // pred_check
          %p191 = pneg %p120
        $region14: #{tpu_custom_call.1} parent=11 // pred_check_branch
          %193 = sbr.rel (%p191) target = $region16
        $region15: #{tpu_custom_call.1} parent=11 // pred_region
          %s195 = ssub.s32 384, 384
          %196 = vsyncadd [#allocation7], %s195
          %s197 = smul.addr %s31, 128
          %s198 = scalar_lea.hbm %s2, %s197
          %s199 = sshll.u32 [#allocation8], 4
          %s200 = int_to_ptr.vmem [resolvable:$true] %s199
          %205 = dma.hbm_to_vmem [thread:$0]  %s198, 384, %s200, [#allocation7], 128, 128, 8
        $region16: #{tpu_custom_call.1} parent=11 // pred_fallthru
          _
        // Predicated region
        $region17: #{tpu_custom_call.1} parent=11 // pred_check
          %p206 = pneg %p146
        $region18: #{tpu_custom_call.1} parent=11 // pred_check_branch
          %208 = sbr.rel (%p206) target = $region20
        $region19: #{tpu_custom_call.1} parent=11 // pred_region
          %p209 = scmp.lt.s32.totalorder %s31, 0
          %s210 = scalar_select %p209, %s31, 0
          %s211 = smul.addr %s210, 8
          %s212 = scalar_lea.vmem %s3, %s211
        $region20: #{tpu_custom_call.1} parent=11 // pred_fallthru
          _
      $region12: #{tpu_custom_call.1} parent=5 // pred_fallthru
        _
      %p213 = scmp.lt.s32.totalorder %s19, 2
      // Predicated region
      $region21: #{tpu_custom_call.1} parent=5 // pred_check
        %p214 = pneg %p213
      $region22: #{tpu_custom_call.1} parent=5 // pred_check_branch
        %216 = sbr.rel (%p214) target = $region24
      $region23: #{tpu_custom_call.1} parent=5 // pred_region
        // Predicated region
        $region25: #{tpu_custom_call.1} parent=23 // pred_check
          %p217 = pneg %p60
        $region26: #{tpu_custom_call.1} parent=23 // pred_check_branch
          %219 = sbr.rel (%p217) target = $region28
        $region27: #{tpu_custom_call.1} parent=23 // pred_region
          %s220 = sand.u32 %s50, 1
          %s221 = scalar_lea.sflag [#allocation4], %s220
          %s222 = sand.u32 %s50, 1
          %s223 = smul.addr %s222, 8
          %s224 = scalar_lea.vmem [#allocation3], %s223
          %s226 = ssub.s32 128, 128
          %227 = vsyncadd %s221, %s226
          %s228 = sadd.s32 %s27, %s26
          %s229 = smul.addr %s228, 128
          %s230 = scalar_lea.hbm %s0, %s229
          %s232 = sshll.u32 %s224, 4
          %s233 = int_to_ptr.vmem [resolvable:$true] %s232
          %235 = dma.hbm_to_vmem [thread:$0]  %s230, 128, %s233, %s221
        $region28: #{tpu_custom_call.1} parent=23 // pred_fallthru
          _
        // Predicated region
        $region29: #{tpu_custom_call.1} parent=23 // pred_check
          %p236 = pneg %p88
        $region30: #{tpu_custom_call.1} parent=23 // pred_check_branch
          %238 = sbr.rel (%p236) target = $region32
        $region31: #{tpu_custom_call.1} parent=23 // pred_region
          %s239 = sand.u32 %s19, 1
          %s240 = scalar_lea.sflag [#allocation7], %s239
          %s241 = sand.u32 %s78, 1
          %s242 = smul.addr %s241, 8
          %s243 = scalar_lea.vmem [#allocation6], %s242
          %s245 = ssub.s32 128, 128
          %246 = vsyncadd %s240, %s245
          %s247 = sadd.s32 %s27, %s26
          %s248 = smul.addr %s247, 128
          %s249 = scalar_lea.hbm %s1, %s248
          %s251 = sshll.u32 %s243, 4
          %s252 = int_to_ptr.vmem [resolvable:$true] %s251
          %254 = dma.hbm_to_vmem [thread:$0]  %s249, 128, %s252, %s240
        $region32: #{tpu_custom_call.1} parent=23 // pred_fallthru
          _
      $region24: #{tpu_custom_call.1} parent=5 // pred_fallthru
        _
      %p255 = scmp.le.s32.totalorder 1, %s19
      %p256 = scmp.lt.s32.totalorder %s19, 3
      %p257 = pnand %p255, %p256
      %p258 = pneg %p257
      // Predicated region
      $region33: #{tpu_custom_call.1} parent=5 // pred_check
        _
      $region34: #{tpu_custom_call.1} parent=5 // pred_check_branch
        %260 = sbr.rel (%p257) target = $region36
      $region35: #{tpu_custom_call.1} parent=5 // pred_region
        %s261 = ssub.s32 %s19, 1
        %s262 = sand.u32 %s53, 1
        %s263 = scalar_lea.sflag [#allocation4], %s262
        %s264 = sand.u32 %s53, 1
        %s265 = smul.addr %s264, 8
        %s266 = scalar_lea.vmem [#allocation3], %s265
        // Predicated region
        $region37: #{tpu_custom_call.1} parent=35 // pred_check
          %p267 = pneg %p66
        $region38: #{tpu_custom_call.1} parent=35 // pred_check_branch
          %269 = sbr.rel (%p267) target = $region40
        $region39: #{tpu_custom_call.1} parent=35 // pred_region
          %270 = dma.done %s263, 128
        $region40: #{tpu_custom_call.1} parent=35 // pred_fallthru
          _
        %s271 = sand.u32 %s24, 1
        %s272 = scalar_lea.sflag [#allocation7], %s271
        %s273 = sand.u32 %s81, 1
        %s274 = smul.addr %s273, 8
        %s275 = scalar_lea.vmem [#allocation6], %s274
        // Predicated region
        $region41: #{tpu_custom_call.1} parent=35 // pred_check
          %p276 = pneg %p94
        $region42: #{tpu_custom_call.1} parent=35 // pred_check_branch
          %278 = sbr.rel (%p276) target = $region44
        $region43: #{tpu_custom_call.1} parent=35 // pred_region
          %279 = dma.done %s272, 128
        $region44: #{tpu_custom_call.1} parent=35 // pred_fallthru
          _
        // Predicated region
        $region45: #{tpu_custom_call.1} parent=35 // pred_check
          %p280 = pneg %p120
        $region46: #{tpu_custom_call.1} parent=35 // pred_check_branch
          %282 = sbr.rel (%p280) target = $region48
        $region47: #{tpu_custom_call.1} parent=35 // pred_region
          %283 = dma.done [#allocation7], 384
        $region48: #{tpu_custom_call.1} parent=35 // pred_fallthru
          _
        %s284 = sand.u32 %s53, 1
        %s285 = scalar_lea.sflag [#allocation4], %s284
        %s286 = sand.u32 %s53, 1
        %s287 = smul.addr %s286, 8
        %s288 = scalar_lea.vmem [#allocation3], %s287
        %p289 = pneg %p66
        %p290 = pneg %p63
        %s291 = sand.u32 %s24, 1
        %s292 = scalar_lea.sflag [#allocation7], %s291
        %s293 = sand.u32 %s81, 1
        %s294 = smul.addr %s293, 8
        %s295 = scalar_lea.vmem [#allocation6], %s294
        %p296 = pneg %p94
        %p297 = pneg %p91
        %p298 = pneg %p120
        %p299 = pneg %p117
        %p300 = scmp.lt.s32.totalorder %s31, 0
        %s301 = scalar_select %p300, %s31, 0
        %s302 = smul.addr %s301, 8
        %s303 = scalar_lea.vmem %s3, %s302
        %p304 = pneg %p146
        %p305 = pneg %p143
        %p306 = pneg %p176
        %p307 = pneg %p173
        %s308 = sand.u32 %s163, 1
        %s309 = scalar_lea.sflag [#allocation5], %s308
        %s310 = sand.u32 %s163, 1
        %s311 = smul.addr %s310, 8
        %s312 = scalar_lea.vmem [#allocation9], %s311
        %p313 = scmp.lt.s32.totalorder %s31, 0
        %s314 = scalar_select %p313, %s31, 0
        %s315 = smul.addr %s314, 8
        %s316 = scalar_lea.vmem %s3, %s315
        %v317 = vld [vmem:[%s266] sm:$0xff]
        %v318 = vld [vmem:[%s275] sm:$0xff]
        %v319 = vld [vmem:[#allocation2] sm:$0xff]
        %p320 = scmp.eq.s32.totalorder %s30, 0
        %s321 = scalar_select %p320, 1, 0
        %v322 = vstv %s321
        %vm323 = vcmp.eq.s32.totalorder %v322, 1
        %v324 = vsel %vm323, 0.0, %v319
        %vm325 = vcmask 1047616
        %326 = vrot.lane.b32.xlu0 %v318, 8
        %v327 = vpop.permute.xlu0 %326
        %v328 = vsel %vm325, %v327, %v318
        %329 = vrot.lane.b32.xlu0 %v328, 8
        %v330 = vpop.permute.xlu0 %329
        %v331 = vsel %vm325, %v330, %v318
        %v332 = vlaneseq
        %v333 = vand.u32 %v332, 127
        %vm334 = vcmp.eq.s32.totalorder %v333, 0
        %336 = vset.pattern.permute.xlu0 0
        %337 = vperm.xlu0 %336, %v324
        %v338 = vpop.permute.xlu0 %337
        %341 = vrot.lane.b32.xlu0 %v331, 121
        %v342 = vpop.permute.xlu0 %341
        %v344 = vsel %vm334, %v338, %v342
        %s345 = scalar_lea.vmem [#allocation8], 8
        %v346 = vld [vmem:[%s345] sm:$0xff]
        %v347 = vld [vmem:[#allocation8] sm:$0xff]
        %vm348 = vcmask 64512
        %v350 = vsel %vm348, %v347, 0
        %352 = vmatprep.subr.mxu0 0.0
        %v353 = vand.u32 %v344, 4294901760
        %354 = vmatpush1.msra.mxu0 %v353
        %355 = vmatprep.subr.mxu0 0.0
        %356 = vmatpush1.msra.mxu0 0.0
        %357 = vmatprep.subr.mxu0 0.0
        %358 = vmatpush1.msra.mxu0 0.0
        %359 = vmatprep.subr.mxu0 0.0
        %360 = vmatpush1.msra.mxu0 0.0
        %361 = vmatprep.subr.mxu0 0.0
        %362 = vmatpush1.msra.mxu0 0.0
        %363 = vmatprep.subr.mxu0 0.0
        %364 = vmatpush1.msra.mxu0 0.0
        %365 = vmatprep.subr.mxu0 0.0
        %366 = vmatpush1.msra.mxu0 0.0
        %367 = vmatprep.subr.mxu0 0.0
        %368 = vmatpush1.msra.mxu0 0.0
        %369 = vmatprep.subr.mxu0 0.0
        %370 = vmatpush1.msra.mxu0 0.0
        %371 = vmatprep.subr.mxu0 0.0
        %372 = vmatpush1.msra.mxu0 0.0
        %373 = vmatprep.subr.mxu0 0.0
        %374 = vmatpush1.msra.mxu0 0.0
        %375 = vmatprep.subr.mxu0 0.0
        %376 = vmatpush1.msra.mxu0 0.0
        %377 = vmatprep.subr.mxu0 0.0
        %378 = vmatpush1.msra.mxu0 0.0
        %379 = vmatprep.subr.mxu0 0.0
        %380 = vmatpush1.msra.mxu0 0.0
        %381 = vmatprep.subr.mxu0 0.0
        %382 = vmatpush1.msra.mxu0 0.0
        %383 = vmatprep.subr.mxu0 0.0
        %384 = vmatpush1.msra.mxu0 0.0
        %385 = vmatprep.subr.mxu0 0.0
        %386 = vmatpush1.msra.mxu0 0.0
        %387 = vmatprep.subr.mxu0 0.0
        %388 = vmatpush1.msra.mxu0 0.0
        %389 = vmatprep.subr.mxu0 0.0
        %390 = vmatpush1.msra.mxu0 0.0
        %391 = vmatprep.subr.mxu0 0.0
        %392 = vmatpush1.msra.mxu0 0.0
        %393 = vmatprep.subr.mxu0 0.0
        %394 = vmatpush1.msra.mxu0 0.0
        %395 = vmatprep.subr.mxu0 0.0
        %396 = vmatpush1.msra.mxu0 0.0
        %397 = vmatprep.subr.mxu0 0.0
        %398 = vmatpush1.msra.mxu0 0.0
        %399 = vmatprep.subr.mxu0 0.0
        %400 = vmatpush1.msra.mxu0 0.0
        %401 = vmatprep.subr.mxu0 0.0
        %402 = vmatpush1.msra.mxu0 0.0
        %403 = vmatprep.subr.mxu0 0.0
        %404 = vmatpush1.msra.mxu0 0.0
        %405 = vmatprep.subr.mxu0 0.0
        %406 = vmatpush1.msra.mxu0 0.0
        %407 = vmatprep.subr.mxu0 0.0
        %408 = vmatpush1.msra.mxu0 0.0
        %409 = vmatprep.subr.mxu0 0.0
        %410 = vmatpush1.msra.mxu0 0.0
        %411 = vmatprep.subr.mxu0 0.0
        %412 = vmatpush1.msra.mxu0 0.0
        %413 = vmatprep.subr.mxu0 0.0
        %414 = vmatpush1.msra.mxu0 0.0
        %415 = vmatprep.subr.mxu0 0.0
        %416 = vmatpush1.msra.mxu0 0.0
        %417 = vmatprep.mubr.f32.mxu0 0.0
        %v418 = vand.u32 %v350, 4294901760
        %v419 = vsub.f32 %v350, %v418
        %v420 = vand.u32 %v419, 4294901760
        %v421 = vsub.f32 %v419, %v420
        %v422 = vand.u32 %v421, 4294901760
        %423 = vmatmul.mubr.f32.gmra.mrb[0].mxu0 %v422
        %v424 = vpop.f32.mrb[0].mxu0
        %v425 = vadd.f32 0.0, %v424
        %v426 = vpop.f32.mrb[0].mxu0
        %427 = vdwg.mxu0
        %428 = vmatprep.subr.mxu0 0.0
        %v429 = vand.u32 %v344, 4294901760
        %v430 = vsub.f32 %v344, %v429
        %v431 = vand.u32 %v430, 4294901760
        %v432 = vsub.f32 %v430, %v431
        %v433 = vand.u32 %v432, 4294901760
        %434 = vmatpush1.msra.mxu0 %v433
        %435 = vmatprep.subr.mxu0 0.0
        %436 = vmatpush1.msra.mxu0 0.0
        %437 = vmatprep.subr.mxu0 0.0
        %438 = vmatpush1.msra.mxu0 0.0
        %439 = vmatprep.subr.mxu0 0.0
        %440 = vmatpush1.msra.mxu0 0.0
        %441 = vmatprep.subr.mxu0 0.0
        %442 = vmatpush1.msra.mxu0 0.0
        %443 = vmatprep.subr.mxu0 0.0
        %444 = vmatpush1.msra.mxu0 0.0
        %445 = vmatprep.subr.mxu0 0.0
        %446 = vmatpush1.msra.mxu0 0.0
        %447 = vmatprep.subr.mxu0 0.0
        %448 = vmatpush1.msra.mxu0 0.0
        %449 = vmatprep.subr.mxu0 0.0
        %450 = vmatpush1.msra.mxu0 0.0
        %451 = vmatprep.subr.mxu0 0.0
        %452 = vmatpush1.msra.mxu0 0.0
        %453 = vmatprep.subr.mxu0 0.0
        %454 = vmatpush1.msra.mxu0 0.0
        %455 = vmatprep.subr.mxu0 0.0
        %456 = vmatpush1.msra.mxu0 0.0
        %457 = vmatprep.subr.mxu0 0.0
        %458 = vmatpush1.msra.mxu0 0.0
        %459 = vmatprep.subr.mxu0 0.0
        %460 = vmatpush1.msra.mxu0 0.0
        %461 = vmatprep.subr.mxu0 0.0
        %462 = vmatpush1.msra.mxu0 0.0
        %463 = vmatprep.subr.mxu0 0.0
        %464 = vmatpush1.msra.mxu0 0.0
        %465 = vmatprep.subr.mxu0 0.0
        %466 = vmatpush1.msra.mxu0 0.0
        %467 = vmatprep.subr.mxu0 0.0
        %468 = vmatpush1.msra.mxu0 0.0
        %469 = vmatprep.subr.mxu0 0.0
        %470 = vmatpush1.msra.mxu0 0.0
        %471 = vmatprep.subr.mxu0 0.0
        %472 = vmatpush1.msra.mxu0 0.0
        %473 = vmatprep.subr.mxu0 0.0
        %474 = vmatpush1.msra.mxu0 0.0
        %475 = vmatprep.subr.mxu0 0.0
        %476 = vmatpush1.msra.mxu0 0.0
        %477 = vmatprep.subr.mxu0 0.0
        %478 = vmatpush1.msra.mxu0 0.0
        %479 = vmatprep.subr.mxu0 0.0
        %480 = vmatpush1.msra.mxu0 0.0
        %481 = vmatprep.subr.mxu0 0.0
        %482 = vmatpush1.msra.mxu0 0.0
        %483 = vmatprep.subr.mxu0 0.0
        %484 = vmatpush1.msra.mxu0 0.0
        %485 = vmatprep.subr.mxu0 0.0
        %486 = vmatpush1.msra.mxu0 0.0
        %487 = vmatprep.subr.mxu0 0.0
        %488 = vmatpush1.msra.mxu0 0.0
        %489 = vmatprep.subr.mxu0 0.0
        %490 = vmatpush1.msra.mxu0 0.0
        %491 = vmatprep.subr.mxu0 0.0
        %492 = vmatpush1.msra.mxu0 0.0
        %493 = vmatprep.subr.mxu0 0.0
        %494 = vmatpush1.msra.mxu0 0.0
        %495 = vmatprep.subr.mxu0 0.0
        %496 = vmatpush1.msra.mxu0 0.0
        %497 = vmatprep.mubr.f32.mxu0 0.0
        %v498 = vand.u32 %v350, 4294901760
        %499 = vmatmul.mubr.f32.gmra.mrb[0].mxu0 %v498
        %v500 = vpop.f32.mrb[0].mxu0
        %v501 = vadd.f32 %v425, %v500
        %v502 = vpop.f32.mrb[0].mxu0
        %503 = vdwg.mxu0
        %504 = vmatprep.subr.mxu0 0.0
        %v505 = vand.u32 %v344, 4294901760
        %v506 = vsub.f32 %v344, %v505
        %507 = vmatpush1.msra.mxu0 %v506
        %508 = vmatprep.subr.mxu0 0.0
        %509 = vmatpush1.msra.mxu0 0.0
        %510 = vmatprep.subr.mxu0 0.0
        %511 = vmatpush1.msra.mxu0 0.0
        %512 = vmatprep.subr.mxu0 0.0
        %513 = vmatpush1.msra.mxu0 0.0
        %514 = vmatprep.subr.mxu0 0.0
        %515 = vmatpush1.msra.mxu0 0.0
        %516 = vmatprep.subr.mxu0 0.0
        %517 = vmatpush1.msra.mxu0 0.0
        %518 = vmatprep.subr.mxu0 0.0
        %519 = vmatpush1.msra.mxu0 0.0
        %520 = vmatprep.subr.mxu0 0.0
        %521 = vmatpush1.msra.mxu0 0.0
        %522 = vmatprep.subr.mxu0 0.0
        %523 = vmatpush1.msra.mxu0 0.0
        %524 = vmatprep.subr.mxu0 0.0
        %525 = vmatpush1.msra.mxu0 0.0
        %526 = vmatprep.subr.mxu0 0.0
        %527 = vmatpush1.msra.mxu0 0.0
        %528 = vmatprep.subr.mxu0 0.0
        %529 = vmatpush1.msra.mxu0 0.0
        %530 = vmatprep.subr.mxu0 0.0
        %531 = vmatpush1.msra.mxu0 0.0
        %532 = vmatprep.subr.mxu0 0.0
        %533 = vmatpush1.msra.mxu0 0.0
        %534 = vmatprep.subr.mxu0 0.0
        %535 = vmatpush1.msra.mxu0 0.0
        %536 = vmatprep.subr.mxu0 0.0
        %537 = vmatpush1.msra.mxu0 0.0
        %538 = vmatprep.subr.mxu0 0.0
        %539 = vmatpush1.msra.mxu0 0.0
        %540 = vmatprep.subr.mxu0 0.0
        %541 = vmatpush1.msra.mxu0 0.0
        %542 = vmatprep.subr.mxu0 0.0
        %543 = vmatpush1.msra.mxu0 0.0
        %544 = vmatprep.subr.mxu0 0.0
        %545 = vmatpush1.msra.mxu0 0.0
        %546 = vmatprep.subr.mxu0 0.0
        %547 = vmatpush1.msra.mxu0 0.0
        %548 = vmatprep.subr.mxu0 0.0
        %549 = vmatpush1.msra.mxu0 0.0
        %550 = vmatprep.subr.mxu0 0.0
        %551 = vmatpush1.msra.mxu0 0.0
        %552 = vmatprep.subr.mxu0 0.0
        %553 = vmatpush1.msra.mxu0 0.0
        %554 = vmatprep.subr.mxu0 0.0
        %555 = vmatpush1.msra.mxu0 0.0
        %556 = vmatprep.subr.mxu0 0.0
        %557 = vmatpush1.msra.mxu0 0.0
        %558 = vmatprep.subr.mxu0 0.0
        %559 = vmatpush1.msra.mxu0 0.0
        %560 = vmatprep.subr.mxu0 0.0
        %561 = vmatpush1.msra.mxu0 0.0
        %562 = vmatprep.subr.mxu0 0.0
        %563 = vmatpush1.msra.mxu0 0.0
        %564 = vmatprep.subr.mxu0 0.0
        %565 = vmatpush1.msra.mxu0 0.0
        %566 = vmatprep.subr.mxu0 0.0
        %567 = vmatpush1.msra.mxu0 0.0
        %568 = vmatprep.subr.mxu0 0.0
        %569 = vmatpush1.msra.mxu0 0.0
        %570 = vmatprep.mubr.f32.mxu0 0.0
        %v571 = vand.u32 %v350, 4294901760
        %v572 = vsub.f32 %v350, %v571
        %573 = vmatmul.mubr.f32.gmra.mrb[0].mxu0 %v572
        %v574 = vpop.f32.mrb[0].mxu0
        %v575 = vadd.f32 %v501, %v574
        %v576 = vpop.f32.mrb[0].mxu0
        %577 = vdwg.mxu0
        %578 = vmatprep.subr.mxu0 0.0
        %v579 = vand.u32 %v344, 4294901760
        %580 = vmatpush1.msra.mxu0 %v579
        %581 = vmatprep.subr.mxu0 0.0
        %582 = vmatpush1.msra.mxu0 0.0
        %583 = vmatprep.subr.mxu0 0.0
        %584 = vmatpush1.msra.mxu0 0.0
        %585 = vmatprep.subr.mxu0 0.0
        %586 = vmatpush1.msra.mxu0 0.0
        %587 = vmatprep.subr.mxu0 0.0
        %588 = vmatpush1.msra.mxu0 0.0
        %589 = vmatprep.subr.mxu0 0.0
        %590 = vmatpush1.msra.mxu0 0.0
        %591 = vmatprep.subr.mxu0 0.0
        %592 = vmatpush1.msra.mxu0 0.0
        %593 = vmatprep.subr.mxu0 0.0
        %594 = vmatpush1.msra.mxu0 0.0
        %595 = vmatprep.subr.mxu0 0.0
        %596 = vmatpush1.msra.mxu0 0.0
        %597 = vmatprep.subr.mxu0 0.0
        %598 = vmatpush1.msra.mxu0 0.0
        %599 = vmatprep.subr.mxu0 0.0
        %600 = vmatpush1.msra.mxu0 0.0
        %601 = vmatprep.subr.mxu0 0.0
        %602 = vmatpush1.msra.mxu0 0.0
        %603 = vmatprep.subr.mxu0 0.0
        %604 = vmatpush1.msra.mxu0 0.0
        %605 = vmatprep.subr.mxu0 0.0
        %606 = vmatpush1.msra.mxu0 0.0
        %607 = vmatprep.subr.mxu0 0.0
        %608 = vmatpush1.msra.mxu0 0.0
        %609 = vmatprep.subr.mxu0 0.0
        %610 = vmatpush1.msra.mxu0 0.0
        %611 = vmatprep.subr.mxu0 0.0
        %612 = vmatpush1.msra.mxu0 0.0
        %613 = vmatprep.subr.mxu0 0.0
        %614 = vmatpush1.msra.mxu0 0.0
        %615 = vmatprep.subr.mxu0 0.0
        %616 = vmatpush1.msra.mxu0 0.0
        %617 = vmatprep.subr.mxu0 0.0
        %618 = vmatpush1.msra.mxu0 0.0
        %619 = vmatprep.subr.mxu0 0.0
        %620 = vmatpush1.msra.mxu0 0.0
        %621 = vmatprep.subr.mxu0 0.0
        %622 = vmatpush1.msra.mxu0 0.0
        %623 = vmatprep.subr.mxu0 0.0
        %624 = vmatpush1.msra.mxu0 0.0
        %625 = vmatprep.subr.mxu0 0.0
        %626 = vmatpush1.msra.mxu0 0.0
        %627 = vmatprep.subr.mxu0 0.0
        %628 = vmatpush1.msra.mxu0 0.0
        %629 = vmatprep.subr.mxu0 0.0
        %630 = vmatpush1.msra.mxu0 0.0
        %631 = vmatprep.subr.mxu0 0.0
        %632 = vmatpush1.msra.mxu0 0.0
        %633 = vmatprep.subr.mxu0 0.0
        %634 = vmatpush1.msra.mxu0 0.0
        %635 = vmatprep.subr.mxu0 0.0
        %636 = vmatpush1.msra.mxu0 0.0
        %637 = vmatprep.subr.mxu0 0.0
        %638 = vmatpush1.msra.mxu0 0.0
        %639 = vmatprep.subr.mxu0 0.0
        %640 = vmatpush1.msra.mxu0 0.0
        %641 = vmatprep.subr.mxu0 0.0
        %642 = vmatpush1.msra.mxu0 0.0
        %643 = vmatprep.mubr.f32.mxu0 0.0
        %v644 = vand.u32 %v350, 4294901760
        %v645 = vsub.f32 %v350, %v644
        %v646 = vand.u32 %v645, 4294901760
        %647 = vmatmul.mubr.f32.gmra.mrb[0].mxu0 %v646
        %v648 = vpop.f32.mrb[0].mxu0
        %v649 = vadd.f32 %v575, %v648
        %v650 = vpop.f32.mrb[0].mxu0
        %651 = vdwg.mxu0
        %652 = vmatprep.subr.mxu0 0.0
        %v653 = vand.u32 %v344, 4294901760
        %v654 = vsub.f32 %v344, %v653
        %v655 = vand.u32 %v654, 4294901760
        %656 = vmatpush1.msra.mxu0 %v655
        %657 = vmatprep.subr.mxu0 0.0
        %658 = vmatpush1.msra.mxu0 0.0
        %659 = vmatprep.subr.mxu0 0.0
        %660 = vmatpush1.msra.mxu0 0.0
        %661 = vmatprep.subr.mxu0 0.0
        %662 = vmatpush1.msra.mxu0 0.0
        %663 = vmatprep.subr.mxu0 0.0
        %664 = vmatpush1.msra.mxu0 0.0
        %665 = vmatprep.subr.mxu0 0.0
        %666 = vmatpush1.msra.mxu0 0.0
        %667 = vmatprep.subr.mxu0 0.0
        %668 = vmatpush1.msra.mxu0 0.0
        %669 = vmatprep.subr.mxu0 0.0
        %670 = vmatpush1.msra.mxu0 0.0
        %671 = vmatprep.subr.mxu0 0.0
        %672 = vmatpush1.msra.mxu0 0.0
        %673 = vmatprep.subr.mxu0 0.0
        %674 = vmatpush1.msra.mxu0 0.0
        %675 = vmatprep.subr.mxu0 0.0
        %676 = vmatpush1.msra.mxu0 0.0
        %677 = vmatprep.subr.mxu0 0.0
        %678 = vmatpush1.msra.mxu0 0.0
        %679 = vmatprep.subr.mxu0 0.0
        %680 = vmatpush1.msra.mxu0 0.0
        %681 = vmatprep.subr.mxu0 0.0
        %682 = vmatpush1.msra.mxu0 0.0
        %683 = vmatprep.subr.mxu0 0.0
        %684 = vmatpush1.msra.mxu0 0.0
        %685 = vmatprep.subr.mxu0 0.0
        %686 = vmatpush1.msra.mxu0 0.0
        %687 = vmatprep.subr.mxu0 0.0
        %688 = vmatpush1.msra.mxu0 0.0
        %689 = vmatprep.subr.mxu0 0.0
        %690 = vmatpush1.msra.mxu0 0.0
        %691 = vmatprep.subr.mxu0 0.0
        %692 = vmatpush1.msra.mxu0 0.0
        %693 = vmatprep.subr.mxu0 0.0
        %694 = vmatpush1.msra.mxu0 0.0
        %695 = vmatprep.subr.mxu0 0.0
        %696 = vmatpush1.msra.mxu0 0.0
        %697 = vmatprep.subr.mxu0 0.0
        %698 = vmatpush1.msra.mxu0 0.0
        %699 = vmatprep.subr.mxu0 0.0
        %700 = vmatpush1.msra.mxu0 0.0
        %701 = vmatprep.subr.mxu0 0.0
        %702 = vmatpush1.msra.mxu0 0.0
        %703 = vmatprep.subr.mxu0 0.0
        %704 = vmatpush1.msra.mxu0 0.0
        %705 = vmatprep.subr.mxu0 0.0
        %706 = vmatpush1.msra.mxu0 0.0
        %707 = vmatprep.subr.mxu0 0.0
        %708 = vmatpush1.msra.mxu0 0.0
        %709 = vmatprep.subr.mxu0 0.0
        %710 = vmatpush1.msra.mxu0 0.0
        %711 = vmatprep.subr.mxu0 0.0
        %712 = vmatpush1.msra.mxu0 0.0
        %713 = vmatprep.subr.mxu0 0.0
        %714 = vmatpush1.msra.mxu0 0.0
        %715 = vmatprep.subr.mxu0 0.0
        %716 = vmatpush1.msra.mxu0 0.0
        %717 = vmatprep.subr.mxu0 0.0
        %718 = vmatpush1.msra.mxu0 0.0
        %719 = vmatprep.mubr.f32.mxu0 0.0
        %v720 = vand.u32 %v350, 4294901760
        %721 = vmatmul.mubr.f32.gmra.mrb[0].mxu0 %v720
        %v722 = vpop.f32.mrb[0].mxu0
        %v723 = vadd.f32 %v649, %v722
        %v724 = vpop.f32.mrb[0].mxu0
        %725 = vdwg.mxu0
        %726 = vmatprep.subr.mxu0 0.0
        %v727 = vand.u32 %v344, 4294901760
        %728 = vmatpush1.msra.mxu0 %v727
        %729 = vmatprep.subr.mxu0 0.0
        %730 = vmatpush1.msra.mxu0 0.0
        %731 = vmatprep.subr.mxu0 0.0
        %732 = vmatpush1.msra.mxu0 0.0
        %733 = vmatprep.subr.mxu0 0.0
        %734 = vmatpush1.msra.mxu0 0.0
        %735 = vmatprep.subr.mxu0 0.0
        %736 = vmatpush1.msra.mxu0 0.0
        %737 = vmatprep.subr.mxu0 0.0
        %738 = vmatpush1.msra.mxu0 0.0
        %739 = vmatprep.subr.mxu0 0.0
        %740 = vmatpush1.msra.mxu0 0.0
        %741 = vmatprep.subr.mxu0 0.0
        %742 = vmatpush1.msra.mxu0 0.0
        %743 = vmatprep.subr.mxu0 0.0
        %744 = vmatpush1.msra.mxu0 0.0
        %745 = vmatprep.subr.mxu0 0.0
        %746 = vmatpush1.msra.mxu0 0.0
        %747 = vmatprep.subr.mxu0 0.0
        %748 = vmatpush1.msra.mxu0 0.0
        %749 = vmatprep.subr.mxu0 0.0
        %750 = vmatpush1.msra.mxu0 0.0
        %751 = vmatprep.subr.mxu0 0.0
        %752 = vmatpush1.msra.mxu0 0.0
        %753 = vmatprep.subr.mxu0 0.0
        %754 = vmatpush1.msra.mxu0 0.0
        %755 = vmatprep.subr.mxu0 0.0
        %756 = vmatpush1.msra.mxu0 0.0
        %757 = vmatprep.subr.mxu0 0.0
        %758 = vmatpush1.msra.mxu0 0.0
        %759 = vmatprep.subr.mxu0 0.0
        %760 = vmatpush1.msra.mxu0 0.0
        %761 = vmatprep.subr.mxu0 0.0
        %762 = vmatpush1.msra.mxu0 0.0
        %763 = vmatprep.subr.mxu0 0.0
        %764 = vmatpush1.msra.mxu0 0.0
        %765 = vmatprep.subr.mxu0 0.0
        %766 = vmatpush1.msra.mxu0 0.0
        %767 = vmatprep.subr.mxu0 0.0
        %768 = vmatpush1.msra.mxu0 0.0
        %769 = vmatprep.subr.mxu0 0.0
        %770 = vmatpush1.msra.mxu0 0.0
        %771 = vmatprep.subr.mxu0 0.0
        %772 = vmatpush1.msra.mxu0 0.0
        %773 = vmatprep.subr.mxu0 0.0
        %774 = vmatpush1.msra.mxu0 0.0
        %775 = vmatprep.subr.mxu0 0.0
        %776 = vmatpush1.msra.mxu0 0.0
        %777 = vmatprep.subr.mxu0 0.0
        %778 = vmatpush1.msra.mxu0 0.0
        %779 = vmatprep.subr.mxu0 0.0
        %780 = vmatpush1.msra.mxu0 0.0
        %781 = vmatprep.subr.mxu0 0.0
        %782 = vmatpush1.msra.mxu0 0.0
        %783 = vmatprep.subr.mxu0 0.0
        %784 = vmatpush1.msra.mxu0 0.0
        %785 = vmatprep.subr.mxu0 0.0
        %786 = vmatpush1.msra.mxu0 0.0
        %787 = vmatprep.subr.mxu0 0.0
        %788 = vmatpush1.msra.mxu0 0.0
        %789 = vmatprep.subr.mxu0 0.0
        %790 = vmatpush1.msra.mxu0 0.0
        %791 = vmatprep.mubr.f32.mxu0 0.0
        %v792 = vand.u32 %v350, 4294901760
        %793 = vmatmul.mubr.f32.gmra.mrb[0].mxu0 %v792
        %v794 = vpop.f32.mrb[0].mxu0
        %v795 = vadd.f32 %v723, %v794
        %v796 = vpop.f32.mrb[0].mxu0
        %797 = vdwg.mxu0
        %v799 = vsel %vm348, %v346, 0
        %801 = vmatprep.subr.mxu0 0.0
        %v802 = vand.u32 %v317, 4294901760
        %803 = vmatpush1.msra.mxu0 %v802
        %804 = vmatprep.subr.mxu0 0.0
        %805 = vmatpush1.msra.mxu0 0.0
        %806 = vmatprep.subr.mxu0 0.0
        %807 = vmatpush1.msra.mxu0 0.0
        %808 = vmatprep.subr.mxu0 0.0
        %809 = vmatpush1.msra.mxu0 0.0
        %810 = vmatprep.subr.mxu0 0.0
        %811 = vmatpush1.msra.mxu0 0.0
        %812 = vmatprep.subr.mxu0 0.0
        %813 = vmatpush1.msra.mxu0 0.0
        %814 = vmatprep.subr.mxu0 0.0
        %815 = vmatpush1.msra.mxu0 0.0
        %816 = vmatprep.subr.mxu0 0.0
        %817 = vmatpush1.msra.mxu0 0.0
        %818 = vmatprep.subr.mxu0 0.0
        %819 = vmatpush1.msra.mxu0 0.0
        %820 = vmatprep.subr.mxu0 0.0
        %821 = vmatpush1.msra.mxu0 0.0
        %822 = vmatprep.subr.mxu0 0.0
        %823 = vmatpush1.msra.mxu0 0.0
        %824 = vmatprep.subr.mxu0 0.0
        %825 = vmatpush1.msra.mxu0 0.0
        %826 = vmatprep.subr.mxu0 0.0
        %827 = vmatpush1.msra.mxu0 0.0
        %828 = vmatprep.subr.mxu0 0.0
        %829 = vmatpush1.msra.mxu0 0.0
        %830 = vmatprep.subr.mxu0 0.0
        %831 = vmatpush1.msra.mxu0 0.0
        %832 = vmatprep.subr.mxu0 0.0
        %833 = vmatpush1.msra.mxu0 0.0
        %834 = vmatprep.subr.mxu0 0.0
        %835 = vmatpush1.msra.mxu0 0.0
        %836 = vmatprep.subr.mxu0 0.0
        %837 = vmatpush1.msra.mxu0 0.0
        %838 = vmatprep.subr.mxu0 0.0
        %839 = vmatpush1.msra.mxu0 0.0
        %840 = vmatprep.subr.mxu0 0.0
        %841 = vmatpush1.msra.mxu0 0.0
        %842 = vmatprep.subr.mxu0 0.0
        %843 = vmatpush1.msra.mxu0 0.0
        %844 = vmatprep.subr.mxu0 0.0
        %845 = vmatpush1.msra.mxu0 0.0
        %846 = vmatprep.subr.mxu0 0.0
        %847 = vmatpush1.msra.mxu0 0.0
        %848 = vmatprep.subr.mxu0 0.0
        %849 = vmatpush1.msra.mxu0 0.0
        %850 = vmatprep.subr.mxu0 0.0
        %851 = vmatpush1.msra.mxu0 0.0
        %852 = vmatprep.subr.mxu0 0.0
        %853 = vmatpush1.msra.mxu0 0.0
        %854 = vmatprep.subr.mxu0 0.0
        %855 = vmatpush1.msra.mxu0 0.0
        %856 = vmatprep.subr.mxu0 0.0
        %857 = vmatpush1.msra.mxu0 0.0
        %858 = vmatprep.subr.mxu0 0.0
        %859 = vmatpush1.msra.mxu0 0.0
        %860 = vmatprep.subr.mxu0 0.0
        %861 = vmatpush1.msra.mxu0 0.0
        %862 = vmatprep.subr.mxu0 0.0
        %863 = vmatpush1.msra.mxu0 0.0
        %864 = vmatprep.subr.mxu0 0.0
        %865 = vmatpush1.msra.mxu0 0.0
        %866 = vmatprep.mubr.f32.mxu0 0.0
        %v867 = vand.u32 %v799, 4294901760
        %v868 = vsub.f32 %v799, %v867
        %v869 = vand.u32 %v868, 4294901760
        %v870 = vsub.f32 %v868, %v869
        %v871 = vand.u32 %v870, 4294901760
        %872 = vmatmul.mubr.f32.gmra.mrb[0].mxu0 %v871
        %v873 = vpop.f32.mrb[0].mxu0
        %v874 = vadd.f32 %v795, %v873
        %v875 = vpop.f32.mrb[0].mxu0
        %876 = vdwg.mxu0
        %877 = vmatprep.subr.mxu0 0.0
        %v878 = vand.u32 %v317, 4294901760
        %v879 = vsub.f32 %v317, %v878
        %v880 = vand.u32 %v879, 4294901760
        %v881 = vsub.f32 %v879, %v880
        %v882 = vand.u32 %v881, 4294901760
        %883 = vmatpush1.msra.mxu0 %v882
        %884 = vmatprep.subr.mxu0 0.0
        %885 = vmatpush1.msra.mxu0 0.0
        %886 = vmatprep.subr.mxu0 0.0
        %887 = vmatpush1.msra.mxu0 0.0
        %888 = vmatprep.subr.mxu0 0.0
        %889 = vmatpush1.msra.mxu0 0.0
        %890 = vmatprep.subr.mxu0 0.0
        %891 = vmatpush1.msra.mxu0 0.0
        %892 = vmatprep.subr.mxu0 0.0
        %893 = vmatpush1.msra.mxu0 0.0
        %894 = vmatprep.subr.mxu0 0.0
        %895 = vmatpush1.msra.mxu0 0.0
        %896 = vmatprep.subr.mxu0 0.0
        %897 = vmatpush1.msra.mxu0 0.0
        %898 = vmatprep.subr.mxu0 0.0
        %899 = vmatpush1.msra.mxu0 0.0
        %900 = vmatprep.subr.mxu0 0.0
        %901 = vmatpush1.msra.mxu0 0.0
        %902 = vmatprep.subr.mxu0 0.0
        %903 = vmatpush1.msra.mxu0 0.0
        %904 = vmatprep.subr.mxu0 0.0
        %905 = vmatpush1.msra.mxu0 0.0
        %906 = vmatprep.subr.mxu0 0.0
        %907 = vmatpush1.msra.mxu0 0.0
        %908 = vmatprep.subr.mxu0 0.0
        %909 = vmatpush1.msra.mxu0 0.0
        %910 = vmatprep.subr.mxu0 0.0
        %911 = vmatpush1.msra.mxu0 0.0
        %912 = vmatprep.subr.mxu0 0.0
        %913 = vmatpush1.msra.mxu0 0.0
        %914 = vmatprep.subr.mxu0 0.0
        %915 = vmatpush1.msra.mxu0 0.0
        %916 = vmatprep.subr.mxu0 0.0
        %917 = vmatpush1.msra.mxu0 0.0
        %918 = vmatprep.subr.mxu0 0.0
        %919 = vmatpush1.msra.mxu0 0.0
        %920 = vmatprep.subr.mxu0 0.0
        %921 = vmatpush1.msra.mxu0 0.0
        %922 = vmatprep.subr.mxu0 0.0
        %923 = vmatpush1.msra.mxu0 0.0
        %924 = vmatprep.subr.mxu0 0.0
        %925 = vmatpush1.msra.mxu0 0.0
        %926 = vmatprep.subr.mxu0 0.0
        %927 = vmatpush1.msra.mxu0 0.0
        %928 = vmatprep.subr.mxu0 0.0
        %929 = vmatpush1.msra.mxu0 0.0
        %930 = vmatprep.subr.mxu0 0.0
        %931 = vmatpush1.msra.mxu0 0.0
        %932 = vmatprep.subr.mxu0 0.0
        %933 = vmatpush1.msra.mxu0 0.0
        %934 = vmatprep.subr.mxu0 0.0
        %935 = vmatpush1.msra.mxu0 0.0
        %936 = vmatprep.subr.mxu0 0.0
        %937 = vmatpush1.msra.mxu0 0.0
        %938 = vmatprep.subr.mxu0 0.0
        %939 = vmatpush1.msra.mxu0 0.0
        %940 = vmatprep.subr.mxu0 0.0
        %941 = vmatpush1.msra.mxu0 0.0
        %942 = vmatprep.subr.mxu0 0.0
        %943 = vmatpush1.msra.mxu0 0.0
        %944 = vmatprep.subr.mxu0 0.0
        %945 = vmatpush1.msra.mxu0 0.0
        %946 = vmatprep.mubr.f32.mxu0 0.0
        %v947 = vand.u32 %v799, 4294901760
        %948 = vmatmul.mubr.f32.gmra.mrb[0].mxu0 %v947
        %v949 = vpop.f32.mrb[0].mxu0
        %v950 = vadd.f32 %v874, %v949
        %v951 = vpop.f32.mrb[0].mxu0
        %952 = vdwg.mxu0
        %953 = vmatprep.subr.mxu0 0.0
        %v954 = vand.u32 %v317, 4294901760
        %v955 = vsub.f32 %v317, %v954
        %956 = vmatpush1.msra.mxu0 %v955
        %957 = vmatprep.subr.mxu0 0.0
        %958 = vmatpush1.msra.mxu0 0.0
        %959 = vmatprep.subr.mxu0 0.0
        %960 = vmatpush1.msra.mxu0 0.0
        %961 = vmatprep.subr.mxu0 0.0
        %962 = vmatpush1.msra.mxu0 0.0
        %963 = vmatprep.subr.mxu0 0.0
        %964 = vmatpush1.msra.mxu0 0.0
        %965 = vmatprep.subr.mxu0 0.0
        %966 = vmatpush1.msra.mxu0 0.0
        %967 = vmatprep.subr.mxu0 0.0
        %968 = vmatpush1.msra.mxu0 0.0
        %969 = vmatprep.subr.mxu0 0.0
        %970 = vmatpush1.msra.mxu0 0.0
        %971 = vmatprep.subr.mxu0 0.0
        %972 = vmatpush1.msra.mxu0 0.0
        %973 = vmatprep.subr.mxu0 0.0
        %974 = vmatpush1.msra.mxu0 0.0
        %975 = vmatprep.subr.mxu0 0.0
        %976 = vmatpush1.msra.mxu0 0.0
        %977 = vmatprep.subr.mxu0 0.0
        %978 = vmatpush1.msra.mxu0 0.0
        %979 = vmatprep.subr.mxu0 0.0
        %980 = vmatpush1.msra.mxu0 0.0
        %981 = vmatprep.subr.mxu0 0.0
        %982 = vmatpush1.msra.mxu0 0.0
        %983 = vmatprep.subr.mxu0 0.0
        %984 = vmatpush1.msra.mxu0 0.0
        %985 = vmatprep.subr.mxu0 0.0
        %986 = vmatpush1.msra.mxu0 0.0
        %987 = vmatprep.subr.mxu0 0.0
        %988 = vmatpush1.msra.mxu0 0.0
        %989 = vmatprep.subr.mxu0 0.0
        %990 = vmatpush1.msra.mxu0 0.0
        %991 = vmatprep.subr.mxu0 0.0
        %992 = vmatpush1.msra.mxu0 0.0
        %993 = vmatprep.subr.mxu0 0.0
        %994 = vmatpush1.msra.mxu0 0.0
        %995 = vmatprep.subr.mxu0 0.0
        %996 = vmatpush1.msra.mxu0 0.0
        %997 = vmatprep.subr.mxu0 0.0
        %998 = vmatpush1.msra.mxu0 0.0
        %999 = vmatprep.subr.mxu0 0.0
        %1000 = vmatpush1.msra.mxu0 0.0
        %1001 = vmatprep.subr.mxu0 0.0
        %1002 = vmatpush1.msra.mxu0 0.0
        %1003 = vmatprep.subr.mxu0 0.0
        %1004 = vmatpush1.msra.mxu0 0.0
        %1005 = vmatprep.subr.mxu0 0.0
        %1006 = vmatpush1.msra.mxu0 0.0
        %1007 = vmatprep.subr.mxu0 0.0
        %1008 = vmatpush1.msra.mxu0 0.0
        %1009 = vmatprep.subr.mxu0 0.0
        %1010 = vmatpush1.msra.mxu0 0.0
        %1011 = vmatprep.subr.mxu0 0.0
        %1012 = vmatpush1.msra.mxu0 0.0
        %1013 = vmatprep.subr.mxu0 0.0
        %1014 = vmatpush1.msra.mxu0 0.0
        %1015 = vmatprep.subr.mxu0 0.0
        %1016 = vmatpush1.msra.mxu0 0.0
        %1017 = vmatprep.subr.mxu0 0.0
        %1018 = vmatpush1.msra.mxu0 0.0
        %1019 = vmatprep.mubr.f32.mxu0 0.0
        %v1020 = vand.u32 %v799, 4294901760
        %v1021 = vsub.f32 %v799, %v1020
        %1022 = vmatmul.mubr.f32.gmra.mrb[0].mxu0 %v1021
        %v1023 = vpop.f32.mrb[0].mxu0
        %v1024 = vadd.f32 %v950, %v1023
        %v1025 = vpop.f32.mrb[0].mxu0
        %1026 = vdwg.mxu0
        %1027 = vmatprep.subr.mxu0 0.0
        %v1028 = vand.u32 %v317, 4294901760
        %1029 = vmatpush1.msra.mxu0 %v1028
        %1030 = vmatprep.subr.mxu0 0.0
        %1031 = vmatpush1.msra.mxu0 0.0
        %1032 = vmatprep.subr.mxu0 0.0
        %1033 = vmatpush1.msra.mxu0 0.0
        %1034 = vmatprep.subr.mxu0 0.0
        %1035 = vmatpush1.msra.mxu0 0.0
        %1036 = vmatprep.subr.mxu0 0.0
        %1037 = vmatpush1.msra.mxu0 0.0
        %1038 = vmatprep.subr.mxu0 0.0
        %1039 = vmatpush1.msra.mxu0 0.0
        %1040 = vmatprep.subr.mxu0 0.0
        %1041 = vmatpush1.msra.mxu0 0.0
        %1042 = vmatprep.subr.mxu0 0.0
        %1043 = vmatpush1.msra.mxu0 0.0
        %1044 = vmatprep.subr.mxu0 0.0
        %1045 = vmatpush1.msra.mxu0 0.0
        %1046 = vmatprep.subr.mxu0 0.0
        %1047 = vmatpush1.msra.mxu0 0.0
        %1048 = vmatprep.subr.mxu0 0.0
        %1049 = vmatpush1.msra.mxu0 0.0
        %1050 = vmatprep.subr.mxu0 0.0
        %1051 = vmatpush1.msra.mxu0 0.0
        %1052 = vmatprep.subr.mxu0 0.0
        %1053 = vmatpush1.msra.mxu0 0.0
        %1054 = vmatprep.subr.mxu0 0.0
        %1055 = vmatpush1.msra.mxu0 0.0
        %1056 = vmatprep.subr.mxu0 0.0
        %1057 = vmatpush1.msra.mxu0 0.0
        %1058 = vmatprep.subr.mxu0 0.0
        %1059 = vmatpush1.msra.mxu0 0.0
        %1060 = vmatprep.subr.mxu0 0.0
        %1061 = vmatpush1.msra.mxu0 0.0
        %1062 = vmatprep.subr.mxu0 0.0
        %1063 = vmatpush1.msra.mxu0 0.0
        %1064 = vmatprep.subr.mxu0 0.0
        %1065 = vmatpush1.msra.mxu0 0.0
        %1066 = vmatprep.subr.mxu0 0.0
        %1067 = vmatpush1.msra.mxu0 0.0
        %1068 = vmatprep.subr.mxu0 0.0
        %1069 = vmatpush1.msra.mxu0 0.0
        %1070 = vmatprep.subr.mxu0 0.0
        %1071 = vmatpush1.msra.mxu0 0.0
        %1072 = vmatprep.subr.mxu0 0.0
        %1073 = vmatpush1.msra.mxu0 0.0
        %1074 = vmatprep.subr.mxu0 0.0
        %1075 = vmatpush1.msra.mxu0 0.0
        %1076 = vmatprep.subr.mxu0 0.0
        %1077 = vmatpush1.msra.mxu0 0.0
        %1078 = vmatprep.subr.mxu0 0.0
        %1079 = vmatpush1.msra.mxu0 0.0
        %1080 = vmatprep.subr.mxu0 0.0
        %1081 = vmatpush1.msra.mxu0 0.0
        %1082 = vmatprep.subr.mxu0 0.0
        %1083 = vmatpush1.msra.mxu0 0.0
        %1084 = vmatprep.subr.mxu0 0.0
        %1085 = vmatpush1.msra.mxu0 0.0
        %1086 = vmatprep.subr.mxu0 0.0
        %1087 = vmatpush1.msra.mxu0 0.0
        %1088 = vmatprep.subr.mxu0 0.0
        %1089 = vmatpush1.msra.mxu0 0.0
        %1090 = vmatprep.subr.mxu0 0.0
        %1091 = vmatpush1.msra.mxu0 0.0
        %1092 = vmatprep.mubr.f32.mxu0 0.0
        %v1093 = vand.u32 %v799, 4294901760
        %v1094 = vsub.f32 %v799, %v1093
        %v1095 = vand.u32 %v1094, 4294901760
        %1096 = vmatmul.mubr.f32.gmra.mrb[0].mxu0 %v1095
        %v1097 = vpop.f32.mrb[0].mxu0
        %v1098 = vadd.f32 %v1024, %v1097
        %v1099 = vpop.f32.mrb[0].mxu0
        %1100 = vdwg.mxu0
        %1101 = vmatprep.subr.mxu0 0.0
        %v1102 = vand.u32 %v317, 4294901760
        %v1103 = vsub.f32 %v317, %v1102
        %v1104 = vand.u32 %v1103, 4294901760
        %1105 = vmatpush1.msra.mxu0 %v1104
        %1106 = vmatprep.subr.mxu0 0.0
        %1107 = vmatpush1.msra.mxu0 0.0
        %1108 = vmatprep.subr.mxu0 0.0
        %1109 = vmatpush1.msra.mxu0 0.0
        %1110 = vmatprep.subr.mxu0 0.0
        %1111 = vmatpush1.msra.mxu0 0.0
        %1112 = vmatprep.subr.mxu0 0.0
        %1113 = vmatpush1.msra.mxu0 0.0
        %1114 = vmatprep.subr.mxu0 0.0
        %1115 = vmatpush1.msra.mxu0 0.0
        %1116 = vmatprep.subr.mxu0 0.0
        %1117 = vmatpush1.msra.mxu0 0.0
        %1118 = vmatprep.subr.mxu0 0.0
        %1119 = vmatpush1.msra.mxu0 0.0
        %1120 = vmatprep.subr.mxu0 0.0
        %1121 = vmatpush1.msra.mxu0 0.0
        %1122 = vmatprep.subr.mxu0 0.0
        %1123 = vmatpush1.msra.mxu0 0.0
        %1124 = vmatprep.subr.mxu0 0.0
        %1125 = vmatpush1.msra.mxu0 0.0
        %1126 = vmatprep.subr.mxu0 0.0
        %1127 = vmatpush1.msra.mxu0 0.0
        %1128 = vmatprep.subr.mxu0 0.0
        %1129 = vmatpush1.msra.mxu0 0.0
        %1130 = vmatprep.subr.mxu0 0.0
        %1131 = vmatpush1.msra.mxu0 0.0
        %1132 = vmatprep.subr.mxu0 0.0
        %1133 = vmatpush1.msra.mxu0 0.0
        %1134 = vmatprep.subr.mxu0 0.0
        %1135 = vmatpush1.msra.mxu0 0.0
        %1136 = vmatprep.subr.mxu0 0.0
        %1137 = vmatpush1.msra.mxu0 0.0
        %1138 = vmatprep.subr.mxu0 0.0
        %1139 = vmatpush1.msra.mxu0 0.0
        %1140 = vmatprep.subr.mxu0 0.0
        %1141 = vmatpush1.msra.mxu0 0.0
        %1142 = vmatprep.subr.mxu0 0.0
        %1143 = vmatpush1.msra.mxu0 0.0
        %1144 = vmatprep.subr.mxu0 0.0
        %1145 = vmatpush1.msra.mxu0 0.0
        %1146 = vmatprep.subr.mxu0 0.0
        %1147 = vmatpush1.msra.mxu0 0.0
        %1148 = vmatprep.subr.mxu0 0.0
        %1149 = vmatpush1.msra.mxu0 0.0
        %1150 = vmatprep.subr.mxu0 0.0
        %1151 = vmatpush1.msra.mxu0 0.0
        %1152 = vmatprep.subr.mxu0 0.0
        %1153 = vmatpush1.msra.mxu0 0.0
        %1154 = vmatprep.subr.mxu0 0.0
        %1155 = vmatpush1.msra.mxu0 0.0
        %1156 = vmatprep.subr.mxu0 0.0
        %1157 = vmatpush1.msra.mxu0 0.0
        %1158 = vmatprep.subr.mxu0 0.0
        %1159 = vmatpush1.msra.mxu0 0.0
        %1160 = vmatprep.subr.mxu0 0.0
        %1161 = vmatpush1.msra.mxu0 0.0
        %1162 = vmatprep.subr.mxu0 0.0
        %1163 = vmatpush1.msra.mxu0 0.0
        %1164 = vmatprep.subr.mxu0 0.0
        %1165 = vmatpush1.msra.mxu0 0.0
        %1166 = vmatprep.subr.mxu0 0.0
        %1167 = vmatpush1.msra.mxu0 0.0
        %1168 = vmatprep.mubr.f32.mxu0 0.0
        %v1169 = vand.u32 %v799, 4294901760
        %1170 = vmatmul.mubr.f32.gmra.mrb[0].mxu0 %v1169
        %v1171 = vpop.f32.mrb[0].mxu0
        %v1172 = vadd.f32 %v1098, %v1171
        %v1173 = vpop.f32.mrb[0].mxu0
        %1174 = vdwg.mxu0
        %1175 = vmatprep.subr.mxu0 0.0
        %v1176 = vand.u32 %v317, 4294901760
        %1177 = vmatpush1.msra.mxu0 %v1176
        %1178 = vmatprep.subr.mxu0 0.0
        %1179 = vmatpush1.msra.mxu0 0.0
        %1180 = vmatprep.subr.mxu0 0.0
        %1181 = vmatpush1.msra.mxu0 0.0
        %1182 = vmatprep.subr.mxu0 0.0
        %1183 = vmatpush1.msra.mxu0 0.0
        %1184 = vmatprep.subr.mxu0 0.0
        %1185 = vmatpush1.msra.mxu0 0.0
        %1186 = vmatprep.subr.mxu0 0.0
        %1187 = vmatpush1.msra.mxu0 0.0
        %1188 = vmatprep.subr.mxu0 0.0
        %1189 = vmatpush1.msra.mxu0 0.0
        %1190 = vmatprep.subr.mxu0 0.0
        %1191 = vmatpush1.msra.mxu0 0.0
        %1192 = vmatprep.subr.mxu0 0.0
        %1193 = vmatpush1.msra.mxu0 0.0
        %1194 = vmatprep.subr.mxu0 0.0
        %1195 = vmatpush1.msra.mxu0 0.0
        %1196 = vmatprep.subr.mxu0 0.0
        %1197 = vmatpush1.msra.mxu0 0.0
        %1198 = vmatprep.subr.mxu0 0.0
        %1199 = vmatpush1.msra.mxu0 0.0
        %1200 = vmatprep.subr.mxu0 0.0
        %1201 = vmatpush1.msra.mxu0 0.0
        %1202 = vmatprep.subr.mxu0 0.0
        %1203 = vmatpush1.msra.mxu0 0.0
        %1204 = vmatprep.subr.mxu0 0.0
        %1205 = vmatpush1.msra.mxu0 0.0
        %1206 = vmatprep.subr.mxu0 0.0
        %1207 = vmatpush1.msra.mxu0 0.0
        %1208 = vmatprep.subr.mxu0 0.0
        %1209 = vmatpush1.msra.mxu0 0.0
        %1210 = vmatprep.subr.mxu0 0.0
        %1211 = vmatpush1.msra.mxu0 0.0
        %1212 = vmatprep.subr.mxu0 0.0
        %1213 = vmatpush1.msra.mxu0 0.0
        %1214 = vmatprep.subr.mxu0 0.0
        %1215 = vmatpush1.msra.mxu0 0.0
        %1216 = vmatprep.subr.mxu0 0.0
        %1217 = vmatpush1.msra.mxu0 0.0
        %1218 = vmatprep.subr.mxu0 0.0
        %1219 = vmatpush1.msra.mxu0 0.0
        %1220 = vmatprep.subr.mxu0 0.0
        %1221 = vmatpush1.msra.mxu0 0.0
        %1222 = vmatprep.subr.mxu0 0.0
        %1223 = vmatpush1.msra.mxu0 0.0
        %1224 = vmatprep.subr.mxu0 0.0
        %1225 = vmatpush1.msra.mxu0 0.0
        %1226 = vmatprep.subr.mxu0 0.0
        %1227 = vmatpush1.msra.mxu0 0.0
        %1228 = vmatprep.subr.mxu0 0.0
        %1229 = vmatpush1.msra.mxu0 0.0
        %1230 = vmatprep.subr.mxu0 0.0
        %1231 = vmatpush1.msra.mxu0 0.0
        %1232 = vmatprep.subr.mxu0 0.0
        %1233 = vmatpush1.msra.mxu0 0.0
        %1234 = vmatprep.subr.mxu0 0.0
        %1235 = vmatpush1.msra.mxu0 0.0
        %1236 = vmatprep.subr.mxu0 0.0
        %1237 = vmatpush1.msra.mxu0 0.0
        %1238 = vmatprep.subr.mxu0 0.0
        %1239 = vmatpush1.msra.mxu0 0.0
        %1240 = vmatprep.mubr.f32.mxu0 0.0
        %v1241 = vand.u32 %v799, 4294901760
        %1242 = vmatmul.mubr.f32.gmra.mrb[0].mxu0 %v1241
        %v1243 = vpop.f32.mrb[0].mxu0
        %v1244 = vadd.f32 %v1172, %v1243
        %v1245 = vpop.f32.mrb[0].mxu0
        %1246 = vdwg.mxu0
        %s1247 = scalar_lea.vmem [#allocation8], 16
        %v1248 = vld [vmem:[%s1247] sm:$0xff]
        %v1250 = vsel %vm348, %v1248, 0
        %1252 = vmatprep.subr.mxu0 0.0
        %v1253 = vand.u32 %v318, 4294901760
        %1254 = vmatpush1.msra.mxu0 %v1253
        %1255 = vmatprep.subr.mxu0 0.0
        %1256 = vmatpush1.msra.mxu0 0.0
        %1257 = vmatprep.subr.mxu0 0.0
        %1258 = vmatpush1.msra.mxu0 0.0
        %1259 = vmatprep.subr.mxu0 0.0
        %1260 = vmatpush1.msra.mxu0 0.0
        %1261 = vmatprep.subr.mxu0 0.0
        %1262 = vmatpush1.msra.mxu0 0.0
        %1263 = vmatprep.subr.mxu0 0.0
        %1264 = vmatpush1.msra.mxu0 0.0
        %1265 = vmatprep.subr.mxu0 0.0
        %1266 = vmatpush1.msra.mxu0 0.0
        %1267 = vmatprep.subr.mxu0 0.0
        %1268 = vmatpush1.msra.mxu0 0.0
        %1269 = vmatprep.subr.mxu0 0.0
        %1270 = vmatpush1.msra.mxu0 0.0
        %1271 = vmatprep.subr.mxu0 0.0
        %1272 = vmatpush1.msra.mxu0 0.0
        %1273 = vmatprep.subr.mxu0 0.0
        %1274 = vmatpush1.msra.mxu0 0.0
        %1275 = vmatprep.subr.mxu0 0.0
        %1276 = vmatpush1.msra.mxu0 0.0
        %1277 = vmatprep.subr.mxu0 0.0
        %1278 = vmatpush1.msra.mxu0 0.0
        %1279 = vmatprep.subr.mxu0 0.0
        %1280 = vmatpush1.msra.mxu0 0.0
        %1281 = vmatprep.subr.mxu0 0.0
        %1282 = vmatpush1.msra.mxu0 0.0
        %1283 = vmatprep.subr.mxu0 0.0
        %1284 = vmatpush1.msra.mxu0 0.0
        %1285 = vmatprep.subr.mxu0 0.0
        %1286 = vmatpush1.msra.mxu0 0.0
        %1287 = vmatprep.subr.mxu0 0.0
        %1288 = vmatpush1.msra.mxu0 0.0
        %1289 = vmatprep.subr.mxu0 0.0
        %1290 = vmatpush1.msra.mxu0 0.0
        %1291 = vmatprep.subr.mxu0 0.0
        %1292 = vmatpush1.msra.mxu0 0.0
        %1293 = vmatprep.subr.mxu0 0.0
        %1294 = vmatpush1.msra.mxu0 0.0
        %1295 = vmatprep.subr.mxu0 0.0
        %1296 = vmatpush1.msra.mxu0 0.0
        %1297 = vmatprep.subr.mxu0 0.0
        %1298 = vmatpush1.msra.mxu0 0.0
        %1299 = vmatprep.subr.mxu0 0.0
        %1300 = vmatpush1.msra.mxu0 0.0
        %1301 = vmatprep.subr.mxu0 0.0
        %1302 = vmatpush1.msra.mxu0 0.0
        %1303 = vmatprep.subr.mxu0 0.0
        %1304 = vmatpush1.msra.mxu0 0.0
        %1305 = vmatprep.subr.mxu0 0.0
        %1306 = vmatpush1.msra.mxu0 0.0
        %1307 = vmatprep.subr.mxu0 0.0
        %1308 = vmatpush1.msra.mxu0 0.0
        %1309 = vmatprep.subr.mxu0 0.0
        %1310 = vmatpush1.msra.mxu0 0.0
        %1311 = vmatprep.subr.mxu0 0.0
        %1312 = vmatpush1.msra.mxu0 0.0
        %1313 = vmatprep.subr.mxu0 0.0
        %1314 = vmatpush1.msra.mxu0 0.0
        %1315 = vmatprep.subr.mxu0 0.0
        %1316 = vmatpush1.msra.mxu0 0.0
        %1317 = vmatprep.mubr.f32.mxu0 0.0
        %v1318 = vand.u32 %v1250, 4294901760
        %v1319 = vsub.f32 %v1250, %v1318
        %v1320 = vand.u32 %v1319, 4294901760
        %v1321 = vsub.f32 %v1319, %v1320
        %v1322 = vand.u32 %v1321, 4294901760
        %1323 = vmatmul.mubr.f32.gmra.mrb[0].mxu0 %v1322
        %v1324 = vpop.f32.mrb[0].mxu0
        %v1325 = vadd.f32 0.0, %v1324
        %v1326 = vpop.f32.mrb[0].mxu0
        %1327 = vdwg.mxu0
        %1328 = vmatprep.subr.mxu0 0.0
        %v1329 = vand.u32 %v318, 4294901760
        %v1330 = vsub.f32 %v318, %v1329
        %v1331 = vand.u32 %v1330, 4294901760
        %v1332 = vsub.f32 %v1330, %v1331
        %v1333 = vand.u32 %v1332, 4294901760
        %1334 = vmatpush1.msra.mxu0 %v1333
        %1335 = vmatprep.subr.mxu0 0.0
        %1336 = vmatpush1.msra.mxu0 0.0
        %1337 = vmatprep.subr.mxu0 0.0
        %1338 = vmatpush1.msra.mxu0 0.0
        %1339 = vmatprep.subr.mxu0 0.0
        %1340 = vmatpush1.msra.mxu0 0.0
        %1341 = vmatprep.subr.mxu0 0.0
        %1342 = vmatpush1.msra.mxu0 0.0
        %1343 = vmatprep.subr.mxu0 0.0
        %1344 = vmatpush1.msra.mxu0 0.0
        %1345 = vmatprep.subr.mxu0 0.0
        %1346 = vmatpush1.msra.mxu0 0.0
        %1347 = vmatprep.subr.mxu0 0.0
        %1348 = vmatpush1.msra.mxu0 0.0
        %1349 = vmatprep.subr.mxu0 0.0
        %1350 = vmatpush1.msra.mxu0 0.0
        %1351 = vmatprep.subr.mxu0 0.0
        %1352 = vmatpush1.msra.mxu0 0.0
        %1353 = vmatprep.subr.mxu0 0.0
        %1354 = vmatpush1.msra.mxu0 0.0
        %1355 = vmatprep.subr.mxu0 0.0
        %1356 = vmatpush1.msra.mxu0 0.0
        %1357 = vmatprep.subr.mxu0 0.0
        %1358 = vmatpush1.msra.mxu0 0.0
        %1359 = vmatprep.subr.mxu0 0.0
        %1360 = vmatpush1.msra.mxu0 0.0
        %1361 = vmatprep.subr.mxu0 0.0
        %1362 = vmatpush1.msra.mxu0 0.0
        %1363 = vmatprep.subr.mxu0 0.0
        %1364 = vmatpush1.msra.mxu0 0.0
        %1365 = vmatprep.subr.mxu0 0.0
        %1366 = vmatpush1.msra.mxu0 0.0
        %1367 = vmatprep.subr.mxu0 0.0
        %1368 = vmatpush1.msra.mxu0 0.0
        %1369 = vmatprep.subr.mxu0 0.0
        %1370 = vmatpush1.msra.mxu0 0.0
        %1371 = vmatprep.subr.mxu0 0.0
        %1372 = vmatpush1.msra.mxu0 0.0
        %1373 = vmatprep.subr.mxu0 0.0
        %1374 = vmatpush1.msra.mxu0 0.0
        %1375 = vmatprep.subr.mxu0 0.0
        %1376 = vmatpush1.msra.mxu0 0.0
        %1377 = vmatprep.subr.mxu0 0.0
        %1378 = vmatpush1.msra.mxu0 0.0
        %1379 = vmatprep.subr.mxu0 0.0
        %1380 = vmatpush1.msra.mxu0 0.0
        %1381 = vmatprep.subr.mxu0 0.0
        %1382 = vmatpush1.msra.mxu0 0.0
        %1383 = vmatprep.subr.mxu0 0.0
        %1384 = vmatpush1.msra.mxu0 0.0
        %1385 = vmatprep.subr.mxu0 0.0
        %1386 = vmatpush1.msra.mxu0 0.0
        %1387 = vmatprep.subr.mxu0 0.0
        %1388 = vmatpush1.msra.mxu0 0.0
        %1389 = vmatprep.subr.mxu0 0.0
        %1390 = vmatpush1.msra.mxu0 0.0
        %1391 = vmatprep.subr.mxu0 0.0
        %1392 = vmatpush1.msra.mxu0 0.0
        %1393 = vmatprep.subr.mxu0 0.0
        %1394 = vmatpush1.msra.mxu0 0.0
        %1395 = vmatprep.subr.mxu0 0.0
        %1396 = vmatpush1.msra.mxu0 0.0
        %1397 = vmatprep.mubr.f32.mxu0 0.0
        %v1398 = vand.u32 %v1250, 4294901760
        %1399 = vmatmul.mubr.f32.gmra.mrb[0].mxu0 %v1398
        %v1400 = vpop.f32.mrb[0].mxu0
        %v1401 = vadd.f32 %v1325, %v1400
        %v1402 = vpop.f32.mrb[0].mxu0
        %1403 = vdwg.mxu0
        %1404 = vmatprep.subr.mxu0 0.0
        %v1405 = vand.u32 %v318, 4294901760
        %v1406 = vsub.f32 %v318, %v1405
        %1407 = vmatpush1.msra.mxu0 %v1406
        %1408 = vmatprep.subr.mxu0 0.0
        %1409 = vmatpush1.msra.mxu0 0.0
        %1410 = vmatprep.subr.mxu0 0.0
        %1411 = vmatpush1.msra.mxu0 0.0
        %1412 = vmatprep.subr.mxu0 0.0
        %1413 = vmatpush1.msra.mxu0 0.0
        %1414 = vmatprep.subr.mxu0 0.0
        %1415 = vmatpush1.msra.mxu0 0.0
        %1416 = vmatprep.subr.mxu0 0.0
        %1417 = vmatpush1.msra.mxu0 0.0
        %1418 = vmatprep.subr.mxu0 0.0
        %1419 = vmatpush1.msra.mxu0 0.0
        %1420 = vmatprep.subr.mxu0 0.0
        %1421 = vmatpush1.msra.mxu0 0.0
        %1422 = vmatprep.subr.mxu0 0.0
        %1423 = vmatpush1.msra.mxu0 0.0
        %1424 = vmatprep.subr.mxu0 0.0
        %1425 = vmatpush1.msra.mxu0 0.0
        %1426 = vmatprep.subr.mxu0 0.0
        %1427 = vmatpush1.msra.mxu0 0.0
        %1428 = vmatprep.subr.mxu0 0.0
        %1429 = vmatpush1.msra.mxu0 0.0
        %1430 = vmatprep.subr.mxu0 0.0
        %1431 = vmatpush1.msra.mxu0 0.0
        %1432 = vmatprep.subr.mxu0 0.0
        %1433 = vmatpush1.msra.mxu0 0.0
        %1434 = vmatprep.subr.mxu0 0.0
        %1435 = vmatpush1.msra.mxu0 0.0
        %1436 = vmatprep.subr.mxu0 0.0
        %1437 = vmatpush1.msra.mxu0 0.0
        %1438 = vmatprep.subr.mxu0 0.0
        %1439 = vmatpush1.msra.mxu0 0.0
        %1440 = vmatprep.subr.mxu0 0.0
        %1441 = vmatpush1.msra.mxu0 0.0
        %1442 = vmatprep.subr.mxu0 0.0
        %1443 = vmatpush1.msra.mxu0 0.0
        %1444 = vmatprep.subr.mxu0 0.0
        %1445 = vmatpush1.msra.mxu0 0.0
        %1446 = vmatprep.subr.mxu0 0.0
        %1447 = vmatpush1.msra.mxu0 0.0
        %1448 = vmatprep.subr.mxu0 0.0
        %1449 = vmatpush1.msra.mxu0 0.0
        %1450 = vmatprep.subr.mxu0 0.0
        %1451 = vmatpush1.msra.mxu0 0.0
        %1452 = vmatprep.subr.mxu0 0.0
        %1453 = vmatpush1.msra.mxu0 0.0
        %1454 = vmatprep.subr.mxu0 0.0
        %1455 = vmatpush1.msra.mxu0 0.0
        %1456 = vmatprep.subr.mxu0 0.0
        %1457 = vmatpush1.msra.mxu0 0.0
        %1458 = vmatprep.subr.mxu0 0.0
        %1459 = vmatpush1.msra.mxu0 0.0
        %1460 = vmatprep.subr.mxu0 0.0
        %1461 = vmatpush1.msra.mxu0 0.0
        %1462 = vmatprep.subr.mxu0 0.0
        %1463 = vmatpush1.msra.mxu0 0.0
        %1464 = vmatprep.subr.mxu0 0.0
        %1465 = vmatpush1.msra.mxu0 0.0
        %1466 = vmatprep.subr.mxu0 0.0
        %1467 = vmatpush1.msra.mxu0 0.0
        %1468 = vmatprep.subr.mxu0 0.0
        %1469 = vmatpush1.msra.mxu0 0.0
        %1470 = vmatprep.mubr.f32.mxu0 0.0
        %v1471 = vand.u32 %v1250, 4294901760
        %v1472 = vsub.f32 %v1250, %v1471
        %1473 = vmatmul.mubr.f32.gmra.mrb[0].mxu0 %v1472
        %v1474 = vpop.f32.mrb[0].mxu0
        %v1475 = vadd.f32 %v1401, %v1474
        %v1476 = vpop.f32.mrb[0].mxu0
        %1477 = vdwg.mxu0
        %1478 = vmatprep.subr.mxu0 0.0
        %v1479 = vand.u32 %v318, 4294901760
        %1480 = vmatpush1.msra.mxu0 %v1479
        %1481 = vmatprep.subr.mxu0 0.0
        %1482 = vmatpush1.msra.mxu0 0.0
        %1483 = vmatprep.subr.mxu0 0.0
        %1484 = vmatpush1.msra.mxu0 0.0
        %1485 = vmatprep.subr.mxu0 0.0
        %1486 = vmatpush1.msra.mxu0 0.0
        %1487 = vmatprep.subr.mxu0 0.0
        %1488 = vmatpush1.msra.mxu0 0.0
        %1489 = vmatprep.subr.mxu0 0.0
        %1490 = vmatpush1.msra.mxu0 0.0
        %1491 = vmatprep.subr.mxu0 0.0
        %1492 = vmatpush1.msra.mxu0 0.0
        %1493 = vmatprep.subr.mxu0 0.0
        %1494 = vmatpush1.msra.mxu0 0.0
        %1495 = vmatprep.subr.mxu0 0.0
        %1496 = vmatpush1.msra.mxu0 0.0
        %1497 = vmatprep.subr.mxu0 0.0
        %1498 = vmatpush1.msra.mxu0 0.0
        %1499 = vmatprep.subr.mxu0 0.0
        %1500 = vmatpush1.msra.mxu0 0.0
        %1501 = vmatprep.subr.mxu0 0.0
        %1502 = vmatpush1.msra.mxu0 0.0
        %1503 = vmatprep.subr.mxu0 0.0
        %1504 = vmatpush1.msra.mxu0 0.0
        %1505 = vmatprep.subr.mxu0 0.0
        %1506 = vmatpush1.msra.mxu0 0.0
        %1507 = vmatprep.subr.mxu0 0.0
        %1508 = vmatpush1.msra.mxu0 0.0
        %1509 = vmatprep.subr.mxu0 0.0
        %1510 = vmatpush1.msra.mxu0 0.0
        %1511 = vmatprep.subr.mxu0 0.0
        %1512 = vmatpush1.msra.mxu0 0.0
        %1513 = vmatprep.subr.mxu0 0.0
        %1514 = vmatpush1.msra.mxu0 0.0
        %1515 = vmatprep.subr.mxu0 0.0
        %1516 = vmatpush1.msra.mxu0 0.0
        %1517 = vmatprep.subr.mxu0 0.0
        %1518 = vmatpush1.msra.mxu0 0.0
        %1519 = vmatprep.subr.mxu0 0.0
        %1520 = vmatpush1.msra.mxu0 0.0
        %1521 = vmatprep.subr.mxu0 0.0
        %1522 = vmatpush1.msra.mxu0 0.0
        %1523 = vmatprep.subr.mxu0 0.0
        %1524 = vmatpush1.msra.mxu0 0.0
        %1525 = vmatprep.subr.mxu0 0.0
        %1526 = vmatpush1.msra.mxu0 0.0
        %1527 = vmatprep.subr.mxu0 0.0
        %1528 = vmatpush1.msra.mxu0 0.0
        %1529 = vmatprep.subr.mxu0 0.0
        %1530 = vmatpush1.msra.mxu0 0.0
        %1531 = vmatprep.subr.mxu0 0.0
        %1532 = vmatpush1.msra.mxu0 0.0
        %1533 = vmatprep.subr.mxu0 0.0
        %1534 = vmatpush1.msra.mxu0 0.0
        %1535 = vmatprep.subr.mxu0 0.0
        %1536 = vmatpush1.msra.mxu0 0.0
        %1537 = vmatprep.subr.mxu0 0.0
        %1538 = vmatpush1.msra.mxu0 0.0
        %1539 = vmatprep.subr.mxu0 0.0
        %1540 = vmatpush1.msra.mxu0 0.0
        %1541 = vmatprep.subr.mxu0 0.0
        %1542 = vmatpush1.msra.mxu0 0.0
        %1543 = vmatprep.mubr.f32.mxu0 0.0
        %v1544 = vand.u32 %v1250, 4294901760
        %v1545 = vsub.f32 %v1250, %v1544
        %v1546 = vand.u32 %v1545, 4294901760
        %1547 = vmatmul.mubr.f32.gmra.mrb[0].mxu0 %v1546
        %v1548 = vpop.f32.mrb[0].mxu0
        %v1549 = vadd.f32 %v1475, %v1548
        %v1550 = vpop.f32.mrb[0].mxu0
        %1551 = vdwg.mxu0
        %1552 = vmatprep.subr.mxu0 0.0
        %v1553 = vand.u32 %v318, 4294901760
        %v1554 = vsub.f32 %v318, %v1553
        %v1555 = vand.u32 %v1554, 4294901760
        %1556 = vmatpush1.msra.mxu0 %v1555
        %1557 = vmatprep.subr.mxu0 0.0
        %1558 = vmatpush1.msra.mxu0 0.0
        %1559 = vmatprep.subr.mxu0 0.0
        %1560 = vmatpush1.msra.mxu0 0.0
        %1561 = vmatprep.subr.mxu0 0.0
        %1562 = vmatpush1.msra.mxu0 0.0
        %1563 = vmatprep.subr.mxu0 0.0
        %1564 = vmatpush1.msra.mxu0 0.0
        %1565 = vmatprep.subr.mxu0 0.0
        %1566 = vmatpush1.msra.mxu0 0.0
        %1567 = vmatprep.subr.mxu0 0.0
        %1568 = vmatpush1.msra.mxu0 0.0
        %1569 = vmatprep.subr.mxu0 0.0
        %1570 = vmatpush1.msra.mxu0 0.0
        %1571 = vmatprep.subr.mxu0 0.0
        %1572 = vmatpush1.msra.mxu0 0.0
        %1573 = vmatprep.subr.mxu0 0.0
        %1574 = vmatpush1.msra.mxu0 0.0
        %1575 = vmatprep.subr.mxu0 0.0
        %1576 = vmatpush1.msra.mxu0 0.0
        %1577 = vmatprep.subr.mxu0 0.0
        %1578 = vmatpush1.msra.mxu0 0.0
        %1579 = vmatprep.subr.mxu0 0.0
        %1580 = vmatpush1.msra.mxu0 0.0
        %1581 = vmatprep.subr.mxu0 0.0
        %1582 = vmatpush1.msra.mxu0 0.0
        %1583 = vmatprep.subr.mxu0 0.0
        %1584 = vmatpush1.msra.mxu0 0.0
        %1585 = vmatprep.subr.mxu0 0.0
        %1586 = vmatpush1.msra.mxu0 0.0
        %1587 = vmatprep.subr.mxu0 0.0
        %1588 = vmatpush1.msra.mxu0 0.0
        %1589 = vmatprep.subr.mxu0 0.0
        %1590 = vmatpush1.msra.mxu0 0.0
        %1591 = vmatprep.subr.mxu0 0.0
        %1592 = vmatpush1.msra.mxu0 0.0
        %1593 = vmatprep.subr.mxu0 0.0
        %1594 = vmatpush1.msra.mxu0 0.0
        %1595 = vmatprep.subr.mxu0 0.0
        %1596 = vmatpush1.msra.mxu0 0.0
        %1597 = vmatprep.subr.mxu0 0.0
        %1598 = vmatpush1.msra.mxu0 0.0
        %1599 = vmatprep.subr.mxu0 0.0
        %1600 = vmatpush1.msra.mxu0 0.0
        %1601 = vmatprep.subr.mxu0 0.0
        %1602 = vmatpush1.msra.mxu0 0.0
        %1603 = vmatprep.subr.mxu0 0.0
        %1604 = vmatpush1.msra.mxu0 0.0
        %1605 = vmatprep.subr.mxu0 0.0
        %1606 = vmatpush1.msra.mxu0 0.0
        %1607 = vmatprep.subr.mxu0 0.0
        %1608 = vmatpush1.msra.mxu0 0.0
        %1609 = vmatprep.subr.mxu0 0.0
        %1610 = vmatpush1.msra.mxu0 0.0
        %1611 = vmatprep.subr.mxu0 0.0
        %1612 = vmatpush1.msra.mxu0 0.0
        %1613 = vmatprep.subr.mxu0 0.0
        %1614 = vmatpush1.msra.mxu0 0.0
        %1615 = vmatprep.subr.mxu0 0.0
        %1616 = vmatpush1.msra.mxu0 0.0
        %1617 = vmatprep.subr.mxu0 0.0
        %1618 = vmatpush1.msra.mxu0 0.0
        %1619 = vmatprep.mubr.f32.mxu0 0.0
        %v1620 = vand.u32 %v1250, 4294901760
        %1621 = vmatmul.mubr.f32.gmra.mrb[0].mxu0 %v1620
        %v1622 = vpop.f32.mrb[0].mxu0
        %v1623 = vadd.f32 %v1549, %v1622
        %v1624 = vpop.f32.mrb[0].mxu0
        %1625 = vdwg.mxu0
        %1626 = vmatprep.subr.mxu0 0.0
        %v1627 = vand.u32 %v318, 4294901760
        %1628 = vmatpush1.msra.mxu0 %v1627
        %1629 = vmatprep.subr.mxu0 0.0
        %1630 = vmatpush1.msra.mxu0 0.0
        %1631 = vmatprep.subr.mxu0 0.0
        %1632 = vmatpush1.msra.mxu0 0.0
        %1633 = vmatprep.subr.mxu0 0.0
        %1634 = vmatpush1.msra.mxu0 0.0
        %1635 = vmatprep.subr.mxu0 0.0
        %1636 = vmatpush1.msra.mxu0 0.0
        %1637 = vmatprep.subr.mxu0 0.0
        %1638 = vmatpush1.msra.mxu0 0.0
        %1639 = vmatprep.subr.mxu0 0.0
        %1640 = vmatpush1.msra.mxu0 0.0
        %1641 = vmatprep.subr.mxu0 0.0
        %1642 = vmatpush1.msra.mxu0 0.0
        %1643 = vmatprep.subr.mxu0 0.0
        %1644 = vmatpush1.msra.mxu0 0.0
        %1645 = vmatprep.subr.mxu0 0.0
        %1646 = vmatpush1.msra.mxu0 0.0
        %1647 = vmatprep.subr.mxu0 0.0
        %1648 = vmatpush1.msra.mxu0 0.0
        %1649 = vmatprep.subr.mxu0 0.0
        %1650 = vmatpush1.msra.mxu0 0.0
        %1651 = vmatprep.subr.mxu0 0.0
        %1652 = vmatpush1.msra.mxu0 0.0
        %1653 = vmatprep.subr.mxu0 0.0
        %1654 = vmatpush1.msra.mxu0 0.0
        %1655 = vmatprep.subr.mxu0 0.0
        %1656 = vmatpush1.msra.mxu0 0.0
        %1657 = vmatprep.subr.mxu0 0.0
        %1658 = vmatpush1.msra.mxu0 0.0
        %1659 = vmatprep.subr.mxu0 0.0
        %1660 = vmatpush1.msra.mxu0 0.0
        %1661 = vmatprep.subr.mxu0 0.0
        %1662 = vmatpush1.msra.mxu0 0.0
        %1663 = vmatprep.subr.mxu0 0.0
        %1664 = vmatpush1.msra.mxu0 0.0
        %1665 = vmatprep.subr.mxu0 0.0
        %1666 = vmatpush1.msra.mxu0 0.0
        %1667 = vmatprep.subr.mxu0 0.0
        %1668 = vmatpush1.msra.mxu0 0.0
        %1669 = vmatprep.subr.mxu0 0.0
        %1670 = vmatpush1.msra.mxu0 0.0
        %1671 = vmatprep.subr.mxu0 0.0
        %1672 = vmatpush1.msra.mxu0 0.0
        %1673 = vmatprep.subr.mxu0 0.0
        %1674 = vmatpush1.msra.mxu0 0.0
        %1675 = vmatprep.subr.mxu0 0.0
        %1676 = vmatpush1.msra.mxu0 0.0
        %1677 = vmatprep.subr.mxu0 0.0
        %1678 = vmatpush1.msra.mxu0 0.0
        %1679 = vmatprep.subr.mxu0 0.0
        %1680 = vmatpush1.msra.mxu0 0.0
        %1681 = vmatprep.subr.mxu0 0.0
        %1682 = vmatpush1.msra.mxu0 0.0
        %1683 = vmatprep.subr.mxu0 0.0
        %1684 = vmatpush1.msra.mxu0 0.0
        %1685 = vmatprep.subr.mxu0 0.0
        %1686 = vmatpush1.msra.mxu0 0.0
        %1687 = vmatprep.subr.mxu0 0.0
        %1688 = vmatpush1.msra.mxu0 0.0
        %1689 = vmatprep.subr.mxu0 0.0
        %1690 = vmatpush1.msra.mxu0 0.0
        %1691 = vmatprep.mubr.f32.mxu0 0.0
        %v1692 = vand.u32 %v1250, 4294901760
        %1693 = vmatmul.mubr.f32.gmra.mrb[0].mxu0 %v1692
        %v1694 = vpop.f32.mrb[0].mxu0
        %v1695 = vadd.f32 %v1623, %v1694
        %v1696 = vpop.f32.mrb[0].mxu0
        %1697 = vdwg.mxu0
        %v1698 = vadd.f32 %v1244, %v1695
        %v1699 = vld [vmem:[%s316] sm:$0xff]
        %1701 = vset.pattern.permute.xlu0 0
        %1702 = vperm.xlu0 %1701, %v1699
        %v1703 = vpop.permute.xlu0 %1702
        %v1705 = vadd.f32 %v1698, %v1703
        %1706 = vst.msk [vmem:[%s312] sm:$0xff] %vm348, %v1705
        %p1707 = scmp.eq.s32.totalorder %s31, 0
        // Predicated region
        $region49: #{tpu_custom_call.1} parent=35 // pred_check
          %p1708 = pneg %p1707
        $region50: #{tpu_custom_call.1} parent=35 // pred_check_branch
          %1710 = sbr.rel (%p1708) target = $region52
        $region51: #{tpu_custom_call.1} parent=35 // pred_region
          %1712 = vrot.lane.b32.xlu0 %v318, 121
          %v1713 = vpop.permute.xlu0 %1712
          %vm1715 = vcmask 7168
          %1716 = vst.msk [vmem:[#allocation2] sm:$0xff] %vm1715, %v1713
        $region52: #{tpu_custom_call.1} parent=35 // pred_fallthru
          _
        %s1717 = sand.u32 %s163, 1
        %s1718 = scalar_lea.sflag [#allocation5], %s1717
        %s1719 = sand.u32 %s163, 1
        %s1720 = smul.addr %s1719, 8
        %s1721 = scalar_lea.vmem [#allocation9], %s1720
        // Predicated region
        $region53: #{tpu_custom_call.1} parent=35 // pred_check
          %p1722 = pneg %p173
        $region54: #{tpu_custom_call.1} parent=35 // pred_check_branch
          %1724 = sbr.rel (%p1722) target = $region56
        $region55: #{tpu_custom_call.1} parent=35 // pred_region
          %s1726 = ssub.s32 128, 128
          %1727 = vsyncadd %s1718, %s1726
          %s1728 = sadd.s32 %s30, %s31
          %s1729 = sadd.s32 %s1728, %s29
          %s1730 = smul.addr %s1729, 128
          %s1731 = scalar_lea.hbm %s4, %s1730
          %s1733 = sshll.u32 %s1721, 4
          %s1734 = int_to_ptr.vmem [resolvable:$true] %s1733
          %1736 = dma.vmem_to_hbm [thread:$0]  %s1734, 128, %s1731, %s1718
        $region56: #{tpu_custom_call.1} parent=35 // pred_fallthru
          _
      $region36: #{tpu_custom_call.1} parent=5 // pred_fallthru
        _
      %p1737 = scmp.le.s32.totalorder 2, %s19
      // Predicated region
      $region57: #{tpu_custom_call.1} parent=5 // pred_check
        %p1738 = pneg %p1737
      $region58: #{tpu_custom_call.1} parent=5 // pred_check_branch
        %1740 = sbr.rel (%p1738) target = $region60
      $region59: #{tpu_custom_call.1} parent=5 // pred_region
        %s1741 = ssub.s32 %s19, 2
        // Predicated region
        $region61: #{tpu_custom_call.1} parent=59 // pred_check
          %p1742 = pneg %p179
        $region62: #{tpu_custom_call.1} parent=59 // pred_check_branch
          %1744 = sbr.rel (%p1742) target = $region64
        $region63: #{tpu_custom_call.1} parent=59 // pred_region
          %s1745 = sand.u32 %s164, 1
          %s1746 = scalar_lea.sflag [#allocation5], %s1745
          %s1747 = sand.u32 %s164, 1
          %s1748 = smul.addr %s1747, 8
          %s1749 = scalar_lea.vmem [#allocation9], %s1748
          %1750 = dma.done %s1746, 128
        $region64: #{tpu_custom_call.1} parent=59 // pred_fallthru
          _
      $region60: #{tpu_custom_call.1} parent=5 // pred_fallthru
        _
    $region6: #{tpu_custom_call.1} parent=1 // loop_footer
      %s23 = sadd.s32 1, %s19
    $region7: #{tpu_custom_call.1} parent=1 // loop_footer_branch
      %18 = sbr.rel target = $region3
    $region8: #{tpu_custom_call.1} parent=1 // loop_exit
      _
    %1751 = vsyncpa [#allocation4], 1
    %s1752 = scalar_lea.sflag [#allocation4], 1
    %1753 = vsyncpa %s1752, 1
    %1754 = vsyncpa [#allocation7], 1
    %s1755 = scalar_lea.sflag [#allocation7], 1
    %1756 = vsyncpa %s1755, 1
    %1757 = vsyncpa [#allocation5], 1
    %s1758 = scalar_lea.sflag [#allocation5], 1
    %1759 = vsyncpa %s1758, 1

</llo_original>
